<compile_context>
chip_gen: v7x
topology: tpu7x:2x2x1
jax: 0.10.0
libtpu: 0.0.40
codegen_flags: <defaults>
</compile_context>

<pallas_src>
import functools

import jax
import jax.numpy as jnp
from jax import lax
from jax.experimental import pallas as pl
from jax.experimental.pallas import tpu as pltpu

_VMEM_LIMIT = 32 * 1024 * 1024  # within scoped default on v5e/v6e/v7x


# ---------------------------------------------------------------------------
# Fused kernel: QKV projection + causal flash attention + output projection
# ---------------------------------------------------------------------------
def fused_mha_kernel(xq_ref, xkv_ref, wq_ref, wk_ref, wv_ref, wp_ref, bp_ref,
                     o_ref, k_sc, v_sc, *, scale, tq, tkv, n_heads, head_dim):
    qi = pl.program_id(1)

    # ---- K/V projection for the whole sequence: once per batch -------------
    # (xkv block index is constant in qi, so its DMA also happens once/batch.)
    @pl.when(qi == 0)
    def _():
        x_all = xkv_ref[0]                                     # (T, C)
        k_sc[...] = jnp.dot(x_all, wk_ref[...],
                            preferred_element_type=jnp.float32)
        v_sc[...] = jnp.dot(x_all, wv_ref[...],
                            preferred_element_type=jnp.float32)

    # ---- Q projection for this tile, pre-scaled (saves per-kv-step VPU work)
    q = jnp.dot(xq_ref[0], wq_ref[...],
                preferred_element_type=jnp.float32) * scale    # (tq, C) f32

    dn = (((1,), (1,)), ((), ()))   # contract q dim1 with k dim1 (no k.T copy)

    ctx_parts = []
    for h in range(n_heads):        # static unroll; all heads in one grid step
        lo = h * head_dim
        q_h = q[:, lo:lo + head_dim]                           # (tq, Dh)

        # Full (below-diagonal) kv tiles: no masking needed.
        def kv_step(j, carry):
            m, l, acc = carry
            ks = pl.multiple_of(j * tkv, tkv)
            k_blk = k_sc[pl.ds(ks, tkv), :]                    # (tkv, C)
            v_blk = v_sc[pl.ds(ks, tkv), :]
            k_j = k_blk[:, lo:lo + head_dim]
            v_j = v_blk[:, lo:lo + head_dim]
            s = lax.dot_general(q_h, k_j, dn,
                                preferred_element_type=jnp.float32)  # (tq,tkv)
            m_new = jnp.maximum(m, jnp.max(s, axis=-1, keepdims=True))
            alpha = jnp.exp(m - m_new)
            p = jnp.exp(s - m_new)
            l_new = alpha * l + jnp.sum(p, axis=-1, keepdims=True)
            acc_new = alpha * acc + jnp.dot(p, v_j,
                                            preferred_element_type=jnp.float32)
            return m_new, l_new, acc_new

        m0 = jnp.full((tq, 1), -jnp.inf, jnp.float32)
        l0 = jnp.zeros((tq, 1), jnp.float32)
        a0 = jnp.zeros((tq, head_dim), jnp.float32)
        m, l, acc = lax.fori_loop(0, qi, kv_step, (m0, l0, a0))

        # Diagonal (straddling) tile: the only tile that builds a causal mask.
        # Every row has >= 1 unmasked column (col 0), so no -inf/-inf NaNs.
        ks = pl.multiple_of(qi * tkv, tkv)
        k_blk = k_sc[pl.ds(ks, tkv), :]
        v_blk = v_sc[pl.ds(ks, tkv), :]
        k_d = k_blk[:, lo:lo + head_dim]
        v_d = v_blk[:, lo:lo + head_dim]
        s = lax.dot_general(q_h, k_d, dn, preferred_element_type=jnp.float32)
        row = lax.broadcasted_iota(jnp.int32, (tq, tkv), 0)
        col = lax.broadcasted_iota(jnp.int32, (tq, tkv), 1)
        s = jnp.where(col <= row, s, -jnp.inf)
        m_new = jnp.maximum(m, jnp.max(s, axis=-1, keepdims=True))
        alpha = jnp.exp(m - m_new)
        p = jnp.exp(s - m_new)
        l = alpha * l + jnp.sum(p, axis=-1, keepdims=True)
        acc = alpha * acc + jnp.dot(p, v_d, preferred_element_type=jnp.float32)

        # TODO(synk): attention-weight dropout omitted (eval mode / identity).
        ctx_parts.append(acc * pl.reciprocal(l, approx=False))  # exact

    # Lane-dense merged context in the final (tq, C) layout (no XLA transpose).
    ctx = jnp.concatenate(ctx_parts, axis=-1)                   # (tq, C) f32

    # ---- Output projection + bias ------------------------------------------
    y = jnp.dot(ctx.astype(o_ref.dtype), wp_ref[...],
                preferred_element_type=jnp.float32)
    o_ref[0] = (y + bp_ref[...].astype(jnp.float32)).astype(o_ref.dtype)
    # TODO(synk): output dropout omitted (eval mode / identity).


# ---------------------------------------------------------------------------
# Wrapper
# ---------------------------------------------------------------------------
def multi_headed_attention(x, wq, wk, wv, wp, bp, *, q_tile=128):
    """x: (B, T, C); wq/wk/wv: (H, C, Dh); wp: (C, C); bp: (1, C)."""
    B, T, C = x.shape
    H, _, Dh = wq.shape
    assert H * Dh == C, "num_heads * head_size must equal n_embedding"

    tq = T if T <= q_tile else q_tile
    assert T % tq == 0, "T must be a multiple of the query tile"
    tkv = tq
    n_q = T // tq
    scale = C ** -0.5          # as in the PyTorch module (n_embedding, not head_size)
    dtype = x.dtype
    itemsize = jnp.dtype(dtype).itemsize

    # Stack per-head projection weights head-major on columns: (H,C,Dh)->(C,C),
    # so column block [h*Dh:(h+1)*Dh] is head h (matches torch.cat order).
    def stack(w):
        return jnp.transpose(w, (1, 0, 2)).reshape(C, C)

    wq_f = stack(wq).astype(dtype)
    wk_f = stack(wk).astype(dtype)
    wv_f = stack(wv).astype(dtype)
    wp_f = wp.astype(dtype)
    bp_f = bp.astype(dtype)

    # Honest cost estimate: causal attention (not full T*T), single HBM pass.
    causal_cols = (T * (T + tkv)) // 2
    cost = pl.CostEstimate(
        flops=int(2 * B * T * C * (3 * C)        # QKV projections
                  + 4 * B * H * causal_cols * Dh  # QK^T + PV (causal)
                  + 2 * B * T * C * C),           # output projection
        transcendentals=int(B * H * causal_cols),
        bytes_accessed=int((2 * x.size + 4 * C * C + C + B * T * C) * itemsize),
    )

    kernel = functools.partial(fused_mha_kernel, scale=scale, tq=tq, tkv=tkv,
                               n_heads=H, head_dim=Dh)

    # NOTE: weight specs have constant index_maps -> DMA'd once; at large C
    # consider pipeline_mode=pl.Buffered(1) / tiling them for v7x's 64 MiB VMEM.
    out = pl.pallas_call(
        kernel,
        out_shape=jax.ShapeDtypeStruct((B, T, C), dtype),
        grid=(B, n_q),
        in_specs=[
            pl.BlockSpec((1, tq, C), lambda b, i: (b, i, 0)),   # q-tile rows
            pl.BlockSpec((1, T, C), lambda b, i: (b, 0, 0)),    # full seq (K/V), 1 DMA/batch
            pl.BlockSpec((C, C), lambda b, i: (0, 0)),          # Wq
            pl.BlockSpec((C, C), lambda b, i: (0, 0)),          # Wk
            pl.BlockSpec((C, C), lambda b, i: (0, 0)),          # Wv
            pl.BlockSpec((C, C), lambda b, i: (0, 0)),          # Wp
            pl.BlockSpec((1, C), lambda b, i: (0, 0)),          # bp
        ],
        out_specs=pl.BlockSpec((1, tq, C), lambda b, i: (b, i, 0)),
        scratch_shapes=[
            pltpu.VMEM((T, C), jnp.float32),   # K for current batch (persists)
            pltpu.VMEM((T, C), jnp.float32),   # V for current batch (persists)
        ],
        compiler_params=pltpu.CompilerParams(
            dimension_semantics=("parallel", "arbitrary"),
            vmem_limit_bytes=_VMEM_LIMIT),
        cost_estimate=cost,
    )(x, x, wq_f, wk_f, wv_f, wp_f, bp_f)
    return out


# ---------------------------------------------------------------------------
# Pure-JAX reference mirroring the PyTorch forward (eval mode)
# ---------------------------------------------------------------------------
def reference(x, wq, wk, wv, wp, bp):
    B, T, C = x.shape
    H = wq.shape[0]
    scale = C ** -0.5
    mask = jnp.tril(jnp.ones((T, T), dtype=bool))
    outs = []
    for h in range(H):
        q = x @ wq[h]
        k = x @ wk[h]
        v = x @ wv[h]
        s = (q @ jnp.swapaxes(k, -2, -1)) * scale
        s = jnp.where(mask, s, -jnp.inf)
        p = jax.nn.softmax(s, axis=-1)
        outs.append(p @ v)
    cat = jnp.concatenate(outs, axis=-1)
    return cat @ wp + bp[0]


if __name__ == "__main__":
    num_heads, head_size = 4, 8
    n_embedding = num_heads * head_size      # 32

    key = jax.random.PRNGKey(0)
    kx, kq, kk, kv_, kp, kb = jax.random.split(key, 6)

    wq = jax.random.normal(kq, (num_heads, n_embedding, head_size), jnp.float32) * 0.1
    wk = jax.random.normal(kk, (num_heads, n_embedding, head_size), jnp.float32) * 0.1
    wv = jax.random.normal(kv_, (num_heads, n_embedding, head_size), jnp.float32) * 0.1
    wp = jax.random.normal(kp, (n_embedding, n_embedding), jnp.float32) * 0.1
    bp = jax.random.normal(kb, (1, n_embedding), jnp.float32) * 0.1

    ok = True
    # Config 1: tiny (single tile).  Config 2: T=256 exercises the tiled path
    # (2 q-tiles, in-kernel kv loop, diagonal-tile masking, K/V scratch reuse).
    for B, T in [(2, 8), (2, 256)]:
        x = jax.random.normal(kx, (B, T, n_embedding), dtype=jnp.float32)
        out = multi_headed_attention(x, wq, wk, wv, wp, bp)
        out = jax.block_until_ready(out)
        ref = reference(x, wq, wk, wv, wp, bp)
        assert out.shape == (B, T, n_embedding)
        if not jnp.allclose(out, ref, atol=2e-4, rtol=2e-4):
            ok = False
            print(f"MISMATCH at B={B}, T={T}: "
                  f"max abs err {float(jnp.max(jnp.abs(out - ref)))}")

    if ok:
        print("KERNEL_OK")
</pallas_src>

<mosaic_0001>
module attributes {stable_mosaic.version = 11 : i64} {
  func.func @fused_mha_kernel(%arg0: i32, %arg1: i32, %arg2: memref<1x8x32xf32, #tpu.memory_space<vmem>>, %arg3: memref<1x8x32xf32, #tpu.memory_space<vmem>>, %arg4: memref<32x32xf32, #tpu.memory_space<vmem>>, %arg5: memref<32x32xf32, #tpu.memory_space<vmem>>, %arg6: memref<32x32xf32, #tpu.memory_space<vmem>>, %arg7: memref<32x32xf32, #tpu.memory_space<vmem>>, %arg8: memref<1x32xf32, #tpu.memory_space<vmem>>, %arg9: memref<1x8x32xf32, #tpu.memory_space<vmem>>, %arg10: memref<8x32xf32, #tpu.memory_space<vmem>>, %arg11: memref<8x32xf32, #tpu.memory_space<vmem>>) attributes {dimension_semantics = [#tpu.dimension_semantics<parallel>, #tpu.dimension_semantics<arbitrary>], iteration_bounds = array<i64: 2, 1>, scalar_prefetch = 0 : i64, scratch_operands = 2 : i64, tpu.core_type = #tpu.core_type<tc>, window_params = [{transform_indices = @transform_0, window_bounds = array<i64: 1, 8, 32>}, {transform_indices = @transform_1, window_bounds = array<i64: 1, 8, 32>}, {pipeline_mode = #tpu.pipeline_mode<synchronous>, transform_indices = @transform_2, window_bounds = array<i64: 32, 32>}, {pipeline_mode = #tpu.pipeline_mode<synchronous>, transform_indices = @transform_3, window_bounds = array<i64: 32, 32>}, {pipeline_mode = #tpu.pipeline_mode<synchronous>, transform_indices = @transform_4, window_bounds = array<i64: 32, 32>}, {pipeline_mode = #tpu.pipeline_mode<synchronous>, transform_indices = @transform_5, window_bounds = array<i64: 32, 32>}, {pipeline_mode = #tpu.pipeline_mode<synchronous>, transform_indices = @transform_6, window_bounds = array<i64: 1, 32>}, {transform_indices = @transform_7, window_bounds = array<i64: 1, 8, 32>}]} {
    %c0_i32 = arith.constant 0 : i32
    %0 = arith.cmpi eq, %arg1, %c0_i32 : i32
    %1 = arith.extui %0 : i1 to i32
    %c0_i32_0 = arith.constant 0 : i32
    %2 = arith.cmpi ne, %1, %c0_i32_0 : i32
    scf.if %2 {
      %c0_64 = arith.constant 0 : index
      %c0_65 = arith.constant 0 : index
      %c0_66 = arith.constant 0 : index
      %178 = vector.load %arg3[%c0_64, %c0_65, %c0_66] : memref<1x8x32xf32, #tpu.memory_space<vmem>>, vector<1x8x32xf32>
      %179 = vector.shape_cast %178 : vector<1x8x32xf32> to vector<8x32xf32>
      %c0_67 = arith.constant 0 : index
      %c0_68 = arith.constant 0 : index
      %180 = vector.load %arg5[%c0_67, %c0_68] : memref<32x32xf32, #tpu.memory_space<vmem>>, vector<32x32xf32>
      %cst_69 = arith.constant dense<0.000000e+00> : vector<8x32xf32>
      %181 = tpu.matmul %179, %180, %cst_69 {dimension_numbers = #tpu.dot_dimension_numbers<[1], [0], [0], [1], [0, 0, 1, 1], [], []>} : vector<8x32xf32>, vector<32x32xf32>, vector<8x32xf32> -> vector<8x32xf32>
      %c0_70 = arith.constant 0 : index
      %c0_71 = arith.constant 0 : index
      %182 = vector.load %arg10[%c0_70, %c0_71] : memref<8x32xf32, #tpu.memory_space<vmem>>, vector<8x32xf32>
      tpu.vector_store %arg10[%c0_70, %c0_71], %181 {strides = array<i32>} : memref<8x32xf32, #tpu.memory_space<vmem>>, vector<8x32xf32>,
      %c0_72 = arith.constant 0 : index
      %c0_73 = arith.constant 0 : index
      %183 = vector.load %arg6[%c0_72, %c0_73] : memref<32x32xf32, #tpu.memory_space<vmem>>, vector<32x32xf32>
      %cst_74 = arith.constant dense<0.000000e+00> : vector<8x32xf32>
      %184 = tpu.matmul %179, %183, %cst_74 {dimension_numbers = #tpu.dot_dimension_numbers<[1], [0], [0], [1], [0, 0, 1, 1], [], []>} : vector<8x32xf32>, vector<32x32xf32>, vector<8x32xf32> -> vector<8x32xf32>
      %c0_75 = arith.constant 0 : index
      %c0_76 = arith.constant 0 : index
      %185 = vector.load %arg11[%c0_75, %c0_76] : memref<8x32xf32, #tpu.memory_space<vmem>>, vector<8x32xf32>
      tpu.vector_store %arg11[%c0_75, %c0_76], %184 {strides = array<i32>} : memref<8x32xf32, #tpu.memory_space<vmem>>, vector<8x32xf32>,
    } else {
    }
    %c0 = arith.constant 0 : index
    %c0_1 = arith.constant 0 : index
    %c0_2 = arith.constant 0 : index
    %3 = vector.load %arg2[%c0, %c0_1, %c0_2] : memref<1x8x32xf32, #tpu.memory_space<vmem>>, vector<1x8x32xf32>
    %4 = vector.shape_cast %3 : vector<1x8x32xf32> to vector<8x32xf32>
    %c0_3 = arith.constant 0 : index
    %c0_4 = arith.constant 0 : index
    %5 = vector.load %arg4[%c0_3, %c0_4] : memref<32x32xf32, #tpu.memory_space<vmem>>, vector<32x32xf32>
    %cst = arith.constant dense<0.000000e+00> : vector<8x32xf32>
    %6 = tpu.matmul %4, %5, %cst {dimension_numbers = #tpu.dot_dimension_numbers<[1], [0], [0], [1], [0, 0, 1, 1], [], []>} : vector<8x32xf32>, vector<32x32xf32>, vector<8x32xf32> -> vector<8x32xf32>
    %cst_5 = arith.constant 0.176776692 : f32
    %7 = vector.broadcast %cst_5 : f32 to vector<8x32xf32>
    %8 = arith.mulf %6, %7 : vector<8x32xf32>
    %9 = vector.extract_strided_slice %8 {offsets = [0, 0], sizes = [8, 8], strides = [1, 1]} : vector<8x32xf32> to vector<8x8xf32>
    %cst_6 = arith.constant 0xFF800000 : f32
    %10 = vector.broadcast %cst_6 : f32 to vector<8x1xf32>
    %cst_7 = arith.constant 0.000000e+00 : f32
    %11 = vector.broadcast %cst_7 : f32 to vector<8x1xf32>
    %cst_8 = arith.constant 0.000000e+00 : f32
    %12 = vector.broadcast %cst_8 : f32 to vector<8x8xf32>
    %c0_i32_9 = arith.constant 0 : i32
    %13 = arith.subi %arg1, %c0_i32_9 : i32
    %14 = arith.addi %c0_i32_9, %13 : i32
    %c1_i32 = arith.constant 1 : i32
    %15:3 = scf.for %arg12 = %c0_i32_9 to %14 step %c1_i32 iter_args(%arg13 = %10, %arg14 = %11, %arg15 = %12) -> (vector<8x1xf32>, vector<8x1xf32>, vector<8x8xf32>)  : i32 {
      %c8_i32_64 = arith.constant 8 : i32
      %178 = arith.muli %arg12, %c8_i32_64 : i32
      %179 = tpu.assume_multiple %178, 8 : i32
      %180 = arith.index_cast %179 : i32 to index
      %c0_65 = arith.constant 0 : index
      %181 = vector.load %arg10[%180, %c0_65] : memref<8x32xf32, #tpu.memory_space<vmem>>, vector<8x32xf32>
      %182 = arith.index_cast %179 : i32 to index
      %c0_66 = arith.constant 0 : index
      %183 = vector.load %arg11[%182, %c0_66] : memref<8x32xf32, #tpu.memory_space<vmem>>, vector<8x32xf32>
      %184 = vector.extract_strided_slice %181 {offsets = [0, 0], sizes = [8, 8], strides = [1, 1]} : vector<8x32xf32> to vector<8x8xf32>
      %185 = vector.extract_strided_slice %183 {offsets = [0, 0], sizes = [8, 8], strides = [1, 1]} : vector<8x32xf32> to vector<8x8xf32>
      %cst_67 = arith.constant dense<0.000000e+00> : vector<8x8xf32>
      %186 = tpu.matmul %9, %184, %cst_67 {dimension_numbers = #tpu.dot_dimension_numbers<[1], [1], [0], [0], [0, 0, 1, 0], [], []>} : vector<8x8xf32>, vector<8x8xf32>, vector<8x8xf32> -> vector<8x8xf32>
      %cst_68 = arith.constant dense<0xFF800000> : vector<8xf32>
      %187 = vector.multi_reduction <maximumf>, %186, %cst_68 [1] : vector<8x8xf32> to vector<8xf32>
      %188 = vector.shape_cast %187 : vector<8xf32> to vector<8x1xf32>
      %189 = arith.maximumf %arg13, %188 : vector<8x1xf32>
      %190 = arith.subf %arg13, %189 : vector<8x1xf32>
      %191 = math.exp %190 : vector<8x1xf32>
      %192 = vector.broadcast %189 : vector<8x1xf32> to vector<8x8xf32>
      %193 = arith.subf %186, %192 : vector<8x8xf32>
      %194 = math.exp %193 : vector<8x8xf32>
      %195 = arith.mulf %191, %arg14 : vector<8x1xf32>
      %cst_69 = arith.constant dense<0.000000e+00> : vector<8xf32>
      %196 = vector.multi_reduction <add>, %194, %cst_69 [1] : vector<8x8xf32> to vector<8xf32>
      %197 = vector.shape_cast %196 : vector<8xf32> to vector<8x1xf32>
      %198 = arith.addf %195, %197 : vector<8x1xf32>
      %199 = vector.broadcast %191 : vector<8x1xf32> to vector<8x8xf32>
      %200 = arith.mulf %199, %arg15 : vector<8x8xf32>
      %cst_70 = arith.constant dense<0.000000e+00> : vector<8x8xf32>
      %201 = tpu.matmul %194, %185, %cst_70 {dimension_numbers = #tpu.dot_dimension_numbers<[1], [0], [0], [1], [0, 0, 1, 1], [], []>} : vector<8x8xf32>, vector<8x8xf32>, vector<8x8xf32> -> vector<8x8xf32>
      %202 = arith.addf %200, %201 : vector<8x8xf32>
      scf.yield %189, %198, %202 : vector<8x1xf32>, vector<8x1xf32>, vector<8x8xf32>
    }
    %c8_i32 = arith.constant 8 : i32
    %16 = arith.muli %arg1, %c8_i32 : i32
    %17 = tpu.assume_multiple %16, 8 : i32
    %18 = arith.index_cast %17 : i32 to index
    %c0_10 = arith.constant 0 : index
    %19 = vector.load %arg10[%18, %c0_10] : memref<8x32xf32, #tpu.memory_space<vmem>>, vector<8x32xf32>
    %20 = arith.index_cast %17 : i32 to index
    %c0_11 = arith.constant 0 : index
    %21 = vector.load %arg11[%20, %c0_11] : memref<8x32xf32, #tpu.memory_space<vmem>>, vector<8x32xf32>
    %22 = vector.extract_strided_slice %19 {offsets = [0, 0], sizes = [8, 8], strides = [1, 1]} : vector<8x32xf32> to vector<8x8xf32>
    %23 = vector.extract_strided_slice %21 {offsets = [0, 0], sizes = [8, 8], strides = [1, 1]} : vector<8x32xf32> to vector<8x8xf32>
    %cst_12 = arith.constant dense<0.000000e+00> : vector<8x8xf32>
    %24 = tpu.matmul %9, %22, %cst_12 {dimension_numbers = #tpu.dot_dimension_numbers<[1], [1], [0], [0], [0, 0, 1, 0], [], []>} : vector<8x8xf32>, vector<8x8xf32>, vector<8x8xf32> -> vector<8x8xf32>
    %25 = tpu.iota {dimensions = array<i32: 0>} : vector<8x8xi32>
    %26 = tpu.iota {dimensions = array<i32: 1>} : vector<8x8xi32>
    %27 = arith.cmpi sle, %26, %25 : vector<8x8xi32>
    %cst_13 = arith.constant 0xFF800000 : f32
    %28 = vector.broadcast %cst_13 : f32 to vector<8x8xf32>
    %29 = arith.select %27, %24, %28 : vector<8x8xi1>, vector<8x8xf32>
    %cst_14 = arith.constant dense<0xFF800000> : vector<8xf32>
    %30 = vector.multi_reduction <maximumf>, %29, %cst_14 [1] : vector<8x8xf32> to vector<8xf32>
    %31 = vector.shape_cast %30 : vector<8xf32> to vector<8x1xf32>
    %32 = arith.maximumf %15#0, %31 : vector<8x1xf32>
    %33 = arith.subf %15#0, %32 : vector<8x1xf32>
    %34 = math.exp %33 : vector<8x1xf32>
    %35 = vector.broadcast %32 : vector<8x1xf32> to vector<8x8xf32>
    %36 = arith.subf %29, %35 : vector<8x8xf32>
    %37 = math.exp %36 : vector<8x8xf32>
    %38 = arith.mulf %34, %15#1 : vector<8x1xf32>
    %cst_15 = arith.constant dense<0.000000e+00> : vector<8xf32>
    %39 = vector.multi_reduction <add>, %37, %cst_15 [1] : vector<8x8xf32> to vector<8xf32>
    %40 = vector.shape_cast %39 : vector<8xf32> to vector<8x1xf32>
    %41 = arith.addf %38, %40 : vector<8x1xf32>
    %42 = vector.broadcast %34 : vector<8x1xf32> to vector<8x8xf32>
    %43 = arith.mulf %42, %15#2 : vector<8x8xf32>
    %cst_16 = arith.constant dense<0.000000e+00> : vector<8x8xf32>
    %44 = tpu.matmul %37, %23, %cst_16 {dimension_numbers = #tpu.dot_dimension_numbers<[1], [0], [0], [1], [0, 0, 1, 1], [], []>} : vector<8x8xf32>, vector<8x8xf32>, vector<8x8xf32> -> vector<8x8xf32>
    %45 = arith.addf %43, %44 : vector<8x8xf32>
    %46 = tpu.reciprocal %41 : vector<8x1xf32> -> vector<8x1xf32>
    %47 = vector.broadcast %46 : vector<8x1xf32> to vector<8x8xf32>
    %48 = arith.mulf %45, %47 : vector<8x8xf32>
    %49 = vector.extract_strided_slice %8 {offsets = [0, 8], sizes = [8, 8], strides = [1, 1]} : vector<8x32xf32> to vector<8x8xf32>
    %cst_17 = arith.constant 0xFF800000 : f32
    %50 = vector.broadcast %cst_17 : f32 to vector<8x1xf32>
    %cst_18 = arith.constant 0.000000e+00 : f32
    %51 = vector.broadcast %cst_18 : f32 to vector<8x1xf32>
    %cst_19 = arith.constant 0.000000e+00 : f32
    %52 = vector.broadcast %cst_19 : f32 to vector<8x8xf32>
    %c0_i32_20 = arith.constant 0 : i32
    %53 = arith.subi %arg1, %c0_i32_20 : i32
    %54 = arith.addi %c0_i32_20, %53 : i32
    %c1_i32_21 = arith.constant 1 : i32
    %55:3 = scf.for %arg12 = %c0_i32_20 to %54 step %c1_i32_21 iter_args(%arg13 = %50, %arg14 = %51, %arg15 = %52) -> (vector<8x1xf32>, vector<8x1xf32>, vector<8x8xf32>)  : i32 {
      %c8_i32_64 = arith.constant 8 : i32
      %178 = arith.muli %arg12, %c8_i32_64 : i32
      %179 = tpu.assume_multiple %178, 8 : i32
      %180 = arith.index_cast %179 : i32 to index
      %c0_65 = arith.constant 0 : index
      %181 = vector.load %arg10[%180, %c0_65] : memref<8x32xf32, #tpu.memory_space<vmem>>, vector<8x32xf32>
      %182 = arith.index_cast %179 : i32 to index
      %c0_66 = arith.constant 0 : index
      %183 = vector.load %arg11[%182, %c0_66] : memref<8x32xf32, #tpu.memory_space<vmem>>, vector<8x32xf32>
      %184 = vector.extract_strided_slice %181 {offsets = [0, 8], sizes = [8, 8], strides = [1, 1]} : vector<8x32xf32> to vector<8x8xf32>
      %185 = vector.extract_strided_slice %183 {offsets = [0, 8], sizes = [8, 8], strides = [1, 1]} : vector<8x32xf32> to vector<8x8xf32>
      %cst_67 = arith.constant dense<0.000000e+00> : vector<8x8xf32>
      %186 = tpu.matmul %49, %184, %cst_67 {dimension_numbers = #tpu.dot_dimension_numbers<[1], [1], [0], [0], [0, 0, 1, 0], [], []>} : vector<8x8xf32>, vector<8x8xf32>, vector<8x8xf32> -> vector<8x8xf32>
      %cst_68 = arith.constant dense<0xFF800000> : vector<8xf32>
      %187 = vector.multi_reduction <maximumf>, %186, %cst_68 [1] : vector<8x8xf32> to vector<8xf32>
      %188 = vector.shape_cast %187 : vector<8xf32> to vector<8x1xf32>
      %189 = arith.maximumf %arg13, %188 : vector<8x1xf32>
      %190 = arith.subf %arg13, %189 : vector<8x1xf32>
      %191 = math.exp %190 : vector<8x1xf32>
      %192 = vector.broadcast %189 : vector<8x1xf32> to vector<8x8xf32>
      %193 = arith.subf %186, %192 : vector<8x8xf32>
      %194 = math.exp %193 : vector<8x8xf32>
      %195 = arith.mulf %191, %arg14 : vector<8x1xf32>
      %cst_69 = arith.constant dense<0.000000e+00> : vector<8xf32>
      %196 = vector.multi_reduction <add>, %194, %cst_69 [1] : vector<8x8xf32> to vector<8xf32>
      %197 = vector.shape_cast %196 : vector<8xf32> to vector<8x1xf32>
      %198 = arith.addf %195, %197 : vector<8x1xf32>
      %199 = vector.broadcast %191 : vector<8x1xf32> to vector<8x8xf32>
      %200 = arith.mulf %199, %arg15 : vector<8x8xf32>
      %cst_70 = arith.constant dense<0.000000e+00> : vector<8x8xf32>
      %201 = tpu.matmul %194, %185, %cst_70 {dimension_numbers = #tpu.dot_dimension_numbers<[1], [0], [0], [1], [0, 0, 1, 1], [], []>} : vector<8x8xf32>, vector<8x8xf32>, vector<8x8xf32> -> vector<8x8xf32>
      %202 = arith.addf %200, %201 : vector<8x8xf32>
      scf.yield %189, %198, %202 : vector<8x1xf32>, vector<8x1xf32>, vector<8x8xf32>
    }
    %c8_i32_22 = arith.constant 8 : i32
    %56 = arith.muli %arg1, %c8_i32_22 : i32
    %57 = tpu.assume_multiple %56, 8 : i32
    %58 = arith.index_cast %57 : i32 to index
    %c0_23 = arith.constant 0 : index
    %59 = vector.load %arg10[%58, %c0_23] : memref<8x32xf32, #tpu.memory_space<vmem>>, vector<8x32xf32>
    %60 = arith.index_cast %57 : i32 to index
    %c0_24 = arith.constant 0 : index
    %61 = vector.load %arg11[%60, %c0_24] : memref<8x32xf32, #tpu.memory_space<vmem>>, vector<8x32xf32>
    %62 = vector.extract_strided_slice %59 {offsets = [0, 8], sizes = [8, 8], strides = [1, 1]} : vector<8x32xf32> to vector<8x8xf32>
    %63 = vector.extract_strided_slice %61 {offsets = [0, 8], sizes = [8, 8], strides = [1, 1]} : vector<8x32xf32> to vector<8x8xf32>
    %cst_25 = arith.constant dense<0.000000e+00> : vector<8x8xf32>
    %64 = tpu.matmul %49, %62, %cst_25 {dimension_numbers = #tpu.dot_dimension_numbers<[1], [1], [0], [0], [0, 0, 1, 0], [], []>} : vector<8x8xf32>, vector<8x8xf32>, vector<8x8xf32> -> vector<8x8xf32>
    %65 = tpu.iota {dimensions = array<i32: 0>} : vector<8x8xi32>
    %66 = tpu.iota {dimensions = array<i32: 1>} : vector<8x8xi32>
    %67 = arith.cmpi sle, %66, %65 : vector<8x8xi32>
    %cst_26 = arith.constant 0xFF800000 : f32
    %68 = vector.broadcast %cst_26 : f32 to vector<8x8xf32>
    %69 = arith.select %67, %64, %68 : vector<8x8xi1>, vector<8x8xf32>
    %cst_27 = arith.constant dense<0xFF800000> : vector<8xf32>
    %70 = vector.multi_reduction <maximumf>, %69, %cst_27 [1] : vector<8x8xf32> to vector<8xf32>
    %71 = vector.shape_cast %70 : vector<8xf32> to vector<8x1xf32>
    %72 = arith.maximumf %55#0, %71 : vector<8x1xf32>
    %73 = arith.subf %55#0, %72 : vector<8x1xf32>
    %74 = math.exp %73 : vector<8x1xf32>
    %75 = vector.broadcast %72 : vector<8x1xf32> to vector<8x8xf32>
    %76 = arith.subf %69, %75 : vector<8x8xf32>
    %77 = math.exp %76 : vector<8x8xf32>
    %78 = arith.mulf %74, %55#1 : vector<8x1xf32>
    %cst_28 = arith.constant dense<0.000000e+00> : vector<8xf32>
    %79 = vector.multi_reduction <add>, %77, %cst_28 [1] : vector<8x8xf32> to vector<8xf32>
    %80 = vector.shape_cast %79 : vector<8xf32> to vector<8x1xf32>
    %81 = arith.addf %78, %80 : vector<8x1xf32>
    %82 = vector.broadcast %74 : vector<8x1xf32> to vector<8x8xf32>
    %83 = arith.mulf %82, %55#2 : vector<8x8xf32>
    %cst_29 = arith.constant dense<0.000000e+00> : vector<8x8xf32>
    %84 = tpu.matmul %77, %63, %cst_29 {dimension_numbers = #tpu.dot_dimension_numbers<[1], [0], [0], [1], [0, 0, 1, 1], [], []>} : vector<8x8xf32>, vector<8x8xf32>, vector<8x8xf32> -> vector<8x8xf32>
    %85 = arith.addf %83, %84 : vector<8x8xf32>
    %86 = tpu.reciprocal %81 : vector<8x1xf32> -> vector<8x1xf32>
    %87 = vector.broadcast %86 : vector<8x1xf32> to vector<8x8xf32>
    %88 = arith.mulf %85, %87 : vector<8x8xf32>
    %89 = vector.extract_strided_slice %8 {offsets = [0, 16], sizes = [8, 8], strides = [1, 1]} : vector<8x32xf32> to vector<8x8xf32>
    %cst_30 = arith.constant 0xFF800000 : f32
    %90 = vector.broadcast %cst_30 : f32 to vector<8x1xf32>
    %cst_31 = arith.constant 0.000000e+00 : f32
    %91 = vector.broadcast %cst_31 : f32 to vector<8x1xf32>
    %cst_32 = arith.constant 0.000000e+00 : f32
    %92 = vector.broadcast %cst_32 : f32 to vector<8x8xf32>
    %c0_i32_33 = arith.constant 0 : i32
    %93 = arith.subi %arg1, %c0_i32_33 : i32
    %94 = arith.addi %c0_i32_33, %93 : i32
    %c1_i32_34 = arith.constant 1 : i32
    %95:3 = scf.for %arg12 = %c0_i32_33 to %94 step %c1_i32_34 iter_args(%arg13 = %90, %arg14 = %91, %arg15 = %92) -> (vector<8x1xf32>, vector<8x1xf32>, vector<8x8xf32>)  : i32 {
      %c8_i32_64 = arith.constant 8 : i32
      %178 = arith.muli %arg12, %c8_i32_64 : i32
      %179 = tpu.assume_multiple %178, 8 : i32
      %180 = arith.index_cast %179 : i32 to index
      %c0_65 = arith.constant 0 : index
      %181 = vector.load %arg10[%180, %c0_65] : memref<8x32xf32, #tpu.memory_space<vmem>>, vector<8x32xf32>
      %182 = arith.index_cast %179 : i32 to index
      %c0_66 = arith.constant 0 : index
      %183 = vector.load %arg11[%182, %c0_66] : memref<8x32xf32, #tpu.memory_space<vmem>>, vector<8x32xf32>
      %184 = vector.extract_strided_slice %181 {offsets = [0, 16], sizes = [8, 8], strides = [1, 1]} : vector<8x32xf32> to vector<8x8xf32>
      %185 = vector.extract_strided_slice %183 {offsets = [0, 16], sizes = [8, 8], strides = [1, 1]} : vector<8x32xf32> to vector<8x8xf32>
      %cst_67 = arith.constant dense<0.000000e+00> : vector<8x8xf32>
      %186 = tpu.matmul %89, %184, %cst_67 {dimension_numbers = #tpu.dot_dimension_numbers<[1], [1], [0], [0], [0, 0, 1, 0], [], []>} : vector<8x8xf32>, vector<8x8xf32>, vector<8x8xf32> -> vector<8x8xf32>
      %cst_68 = arith.constant dense<0xFF800000> : vector<8xf32>
      %187 = vector.multi_reduction <maximumf>, %186, %cst_68 [1] : vector<8x8xf32> to vector<8xf32>
      %188 = vector.shape_cast %187 : vector<8xf32> to vector<8x1xf32>
      %189 = arith.maximumf %arg13, %188 : vector<8x1xf32>
      %190 = arith.subf %arg13, %189 : vector<8x1xf32>
      %191 = math.exp %190 : vector<8x1xf32>
      %192 = vector.broadcast %189 : vector<8x1xf32> to vector<8x8xf32>
      %193 = arith.subf %186, %192 : vector<8x8xf32>
      %194 = math.exp %193 : vector<8x8xf32>
      %195 = arith.mulf %191, %arg14 : vector<8x1xf32>
      %cst_69 = arith.constant dense<0.000000e+00> : vector<8xf32>
      %196 = vector.multi_reduction <add>, %194, %cst_69 [1] : vector<8x8xf32> to vector<8xf32>
      %197 = vector.shape_cast %196 : vector<8xf32> to vector<8x1xf32>
      %198 = arith.addf %195, %197 : vector<8x1xf32>
      %199 = vector.broadcast %191 : vector<8x1xf32> to vector<8x8xf32>
      %200 = arith.mulf %199, %arg15 : vector<8x8xf32>
      %cst_70 = arith.constant dense<0.000000e+00> : vector<8x8xf32>
      %201 = tpu.matmul %194, %185, %cst_70 {dimension_numbers = #tpu.dot_dimension_numbers<[1], [0], [0], [1], [0, 0, 1, 1], [], []>} : vector<8x8xf32>, vector<8x8xf32>, vector<8x8xf32> -> vector<8x8xf32>
      %202 = arith.addf %200, %201 : vector<8x8xf32>
      scf.yield %189, %198, %202 : vector<8x1xf32>, vector<8x1xf32>, vector<8x8xf32>
    }
    %c8_i32_35 = arith.constant 8 : i32
    %96 = arith.muli %arg1, %c8_i32_35 : i32
    %97 = tpu.assume_multiple %96, 8 : i32
    %98 = arith.index_cast %97 : i32 to index
    %c0_36 = arith.constant 0 : index
    %99 = vector.load %arg10[%98, %c0_36] : memref<8x32xf32, #tpu.memory_space<vmem>>, vector<8x32xf32>
    %100 = arith.index_cast %97 : i32 to index
    %c0_37 = arith.constant 0 : index
    %101 = vector.load %arg11[%100, %c0_37] : memref<8x32xf32, #tpu.memory_space<vmem>>, vector<8x32xf32>
    %102 = vector.extract_strided_slice %99 {offsets = [0, 16], sizes = [8, 8], strides = [1, 1]} : vector<8x32xf32> to vector<8x8xf32>
    %103 = vector.extract_strided_slice %101 {offsets = [0, 16], sizes = [8, 8], strides = [1, 1]} : vector<8x32xf32> to vector<8x8xf32>
    %cst_38 = arith.constant dense<0.000000e+00> : vector<8x8xf32>
    %104 = tpu.matmul %89, %102, %cst_38 {dimension_numbers = #tpu.dot_dimension_numbers<[1], [1], [0], [0], [0, 0, 1, 0], [], []>} : vector<8x8xf32>, vector<8x8xf32>, vector<8x8xf32> -> vector<8x8xf32>
    %105 = tpu.iota {dimensions = array<i32: 0>} : vector<8x8xi32>
    %106 = tpu.iota {dimensions = array<i32: 1>} : vector<8x8xi32>
    %107 = arith.cmpi sle, %106, %105 : vector<8x8xi32>
    %cst_39 = arith.constant 0xFF800000 : f32
    %108 = vector.broadcast %cst_39 : f32 to vector<8x8xf32>
    %109 = arith.select %107, %104, %108 : vector<8x8xi1>, vector<8x8xf32>
    %cst_40 = arith.constant dense<0xFF800000> : vector<8xf32>
    %110 = vector.multi_reduction <maximumf>, %109, %cst_40 [1] : vector<8x8xf32> to vector<8xf32>
    %111 = vector.shape_cast %110 : vector<8xf32> to vector<8x1xf32>
    %112 = arith.maximumf %95#0, %111 : vector<8x1xf32>
    %113 = arith.subf %95#0, %112 : vector<8x1xf32>
    %114 = math.exp %113 : vector<8x1xf32>
    %115 = vector.broadcast %112 : vector<8x1xf32> to vector<8x8xf32>
    %116 = arith.subf %109, %115 : vector<8x8xf32>
    %117 = math.exp %116 : vector<8x8xf32>
    %118 = arith.mulf %114, %95#1 : vector<8x1xf32>
    %cst_41 = arith.constant dense<0.000000e+00> : vector<8xf32>
    %119 = vector.multi_reduction <add>, %117, %cst_41 [1] : vector<8x8xf32> to vector<8xf32>
    %120 = vector.shape_cast %119 : vector<8xf32> to vector<8x1xf32>
    %121 = arith.addf %118, %120 : vector<8x1xf32>
    %122 = vector.broadcast %114 : vector<8x1xf32> to vector<8x8xf32>
    %123 = arith.mulf %122, %95#2 : vector<8x8xf32>
    %cst_42 = arith.constant dense<0.000000e+00> : vector<8x8xf32>
    %124 = tpu.matmul %117, %103, %cst_42 {dimension_numbers = #tpu.dot_dimension_numbers<[1], [0], [0], [1], [0, 0, 1, 1], [], []>} : vector<8x8xf32>, vector<8x8xf32>, vector<8x8xf32> -> vector<8x8xf32>
    %125 = arith.addf %123, %124 : vector<8x8xf32>
    %126 = tpu.reciprocal %121 : vector<8x1xf32> -> vector<8x1xf32>
    %127 = vector.broadcast %126 : vector<8x1xf32> to vector<8x8xf32>
    %128 = arith.mulf %125, %127 : vector<8x8xf32>
    %129 = vector.extract_strided_slice %8 {offsets = [0, 24], sizes = [8, 8], strides = [1, 1]} : vector<8x32xf32> to vector<8x8xf32>
    %cst_43 = arith.constant 0xFF800000 : f32
    %130 = vector.broadcast %cst_43 : f32 to vector<8x1xf32>
    %cst_44 = arith.constant 0.000000e+00 : f32
    %131 = vector.broadcast %cst_44 : f32 to vector<8x1xf32>
    %cst_45 = arith.constant 0.000000e+00 : f32
    %132 = vector.broadcast %cst_45 : f32 to vector<8x8xf32>
    %c0_i32_46 = arith.constant 0 : i32
    %133 = arith.subi %arg1, %c0_i32_46 : i32
    %134 = arith.addi %c0_i32_46, %133 : i32
    %c1_i32_47 = arith.constant 1 : i32
    %135:3 = scf.for %arg12 = %c0_i32_46 to %134 step %c1_i32_47 iter_args(%arg13 = %130, %arg14 = %131, %arg15 = %132) -> (vector<8x1xf32>, vector<8x1xf32>, vector<8x8xf32>)  : i32 {
      %c8_i32_64 = arith.constant 8 : i32
      %178 = arith.muli %arg12, %c8_i32_64 : i32
      %179 = tpu.assume_multiple %178, 8 : i32
      %180 = arith.index_cast %179 : i32 to index
      %c0_65 = arith.constant 0 : index
      %181 = vector.load %arg10[%180, %c0_65] : memref<8x32xf32, #tpu.memory_space<vmem>>, vector<8x32xf32>
      %182 = arith.index_cast %179 : i32 to index
      %c0_66 = arith.constant 0 : index
      %183 = vector.load %arg11[%182, %c0_66] : memref<8x32xf32, #tpu.memory_space<vmem>>, vector<8x32xf32>
      %184 = vector.extract_strided_slice %181 {offsets = [0, 24], sizes = [8, 8], strides = [1, 1]} : vector<8x32xf32> to vector<8x8xf32>
      %185 = vector.extract_strided_slice %183 {offsets = [0, 24], sizes = [8, 8], strides = [1, 1]} : vector<8x32xf32> to vector<8x8xf32>
      %cst_67 = arith.constant dense<0.000000e+00> : vector<8x8xf32>
      %186 = tpu.matmul %129, %184, %cst_67 {dimension_numbers = #tpu.dot_dimension_numbers<[1], [1], [0], [0], [0, 0, 1, 0], [], []>} : vector<8x8xf32>, vector<8x8xf32>, vector<8x8xf32> -> vector<8x8xf32>
      %cst_68 = arith.constant dense<0xFF800000> : vector<8xf32>
      %187 = vector.multi_reduction <maximumf>, %186, %cst_68 [1] : vector<8x8xf32> to vector<8xf32>
      %188 = vector.shape_cast %187 : vector<8xf32> to vector<8x1xf32>
      %189 = arith.maximumf %arg13, %188 : vector<8x1xf32>
      %190 = arith.subf %arg13, %189 : vector<8x1xf32>
      %191 = math.exp %190 : vector<8x1xf32>
      %192 = vector.broadcast %189 : vector<8x1xf32> to vector<8x8xf32>
      %193 = arith.subf %186, %192 : vector<8x8xf32>
      %194 = math.exp %193 : vector<8x8xf32>
      %195 = arith.mulf %191, %arg14 : vector<8x1xf32>
      %cst_69 = arith.constant dense<0.000000e+00> : vector<8xf32>
      %196 = vector.multi_reduction <add>, %194, %cst_69 [1] : vector<8x8xf32> to vector<8xf32>
      %197 = vector.shape_cast %196 : vector<8xf32> to vector<8x1xf32>
      %198 = arith.addf %195, %197 : vector<8x1xf32>
      %199 = vector.broadcast %191 : vector<8x1xf32> to vector<8x8xf32>
      %200 = arith.mulf %199, %arg15 : vector<8x8xf32>
      %cst_70 = arith.constant dense<0.000000e+00> : vector<8x8xf32>
      %201 = tpu.matmul %194, %185, %cst_70 {dimension_numbers = #tpu.dot_dimension_numbers<[1], [0], [0], [1], [0, 0, 1, 1], [], []>} : vector<8x8xf32>, vector<8x8xf32>, vector<8x8xf32> -> vector<8x8xf32>
      %202 = arith.addf %200, %201 : vector<8x8xf32>
      scf.yield %189, %198, %202 : vector<8x1xf32>, vector<8x1xf32>, vector<8x8xf32>
    }
    %c8_i32_48 = arith.constant 8 : i32
    %136 = arith.muli %arg1, %c8_i32_48 : i32
    %137 = tpu.assume_multiple %136, 8 : i32
    %138 = arith.index_cast %137 : i32 to index
    %c0_49 = arith.constant 0 : index
    %139 = vector.load %arg10[%138, %c0_49] : memref<8x32xf32, #tpu.memory_space<vmem>>, vector<8x32xf32>
    %140 = arith.index_cast %137 : i32 to index
    %c0_50 = arith.constant 0 : index
    %141 = vector.load %arg11[%140, %c0_50] : memref<8x32xf32, #tpu.memory_space<vmem>>, vector<8x32xf32>
    %142 = vector.extract_strided_slice %139 {offsets = [0, 24], sizes = [8, 8], strides = [1, 1]} : vector<8x32xf32> to vector<8x8xf32>
    %143 = vector.extract_strided_slice %141 {offsets = [0, 24], sizes = [8, 8], strides = [1, 1]} : vector<8x32xf32> to vector<8x8xf32>
    %cst_51 = arith.constant dense<0.000000e+00> : vector<8x8xf32>
    %144 = tpu.matmul %129, %142, %cst_51 {dimension_numbers = #tpu.dot_dimension_numbers<[1], [1], [0], [0], [0, 0, 1, 0], [], []>} : vector<8x8xf32>, vector<8x8xf32>, vector<8x8xf32> -> vector<8x8xf32>
    %145 = tpu.iota {dimensions = array<i32: 0>} : vector<8x8xi32>
    %146 = tpu.iota {dimensions = array<i32: 1>} : vector<8x8xi32>
    %147 = arith.cmpi sle, %146, %145 : vector<8x8xi32>
    %cst_52 = arith.constant 0xFF800000 : f32
    %148 = vector.broadcast %cst_52 : f32 to vector<8x8xf32>
    %149 = arith.select %147, %144, %148 : vector<8x8xi1>, vector<8x8xf32>
    %cst_53 = arith.constant dense<0xFF800000> : vector<8xf32>
    %150 = vector.multi_reduction <maximumf>, %149, %cst_53 [1] : vector<8x8xf32> to vector<8xf32>
    %151 = vector.shape_cast %150 : vector<8xf32> to vector<8x1xf32>
    %152 = arith.maximumf %135#0, %151 : vector<8x1xf32>
    %153 = arith.subf %135#0, %152 : vector<8x1xf32>
    %154 = math.exp %153 : vector<8x1xf32>
    %155 = vector.broadcast %152 : vector<8x1xf32> to vector<8x8xf32>
    %156 = arith.subf %149, %155 : vector<8x8xf32>
    %157 = math.exp %156 : vector<8x8xf32>
    %158 = arith.mulf %154, %135#1 : vector<8x1xf32>
    %cst_54 = arith.constant dense<0.000000e+00> : vector<8xf32>
    %159 = vector.multi_reduction <add>, %157, %cst_54 [1] : vector<8x8xf32> to vector<8xf32>
    %160 = vector.shape_cast %159 : vector<8xf32> to vector<8x1xf32>
    %161 = arith.addf %158, %160 : vector<8x1xf32>
    %162 = vector.broadcast %154 : vector<8x1xf32> to vector<8x8xf32>
    %163 = arith.mulf %162, %135#2 : vector<8x8xf32>
    %cst_55 = arith.constant dense<0.000000e+00> : vector<8x8xf32>
    %164 = tpu.matmul %157, %143, %cst_55 {dimension_numbers = #tpu.dot_dimension_numbers<[1], [0], [0], [1], [0, 0, 1, 1], [], []>} : vector<8x8xf32>, vector<8x8xf32>, vector<8x8xf32> -> vector<8x8xf32>
    %165 = arith.addf %163, %164 : vector<8x8xf32>
    %166 = tpu.reciprocal %161 : vector<8x1xf32> -> vector<8x1xf32>
    %167 = vector.broadcast %166 : vector<8x1xf32> to vector<8x8xf32>
    %168 = arith.mulf %165, %167 : vector<8x8xf32>
    %169 = tpu.concatenate %48, %88, %128, %168 in 1 : vector<8x8xf32>, vector<8x8xf32>, vector<8x8xf32>, vector<8x8xf32> -> vector<8x32xf32>
    %c0_56 = arith.constant 0 : index
    %c0_57 = arith.constant 0 : index
    %170 = vector.load %arg7[%c0_56, %c0_57] : memref<32x32xf32, #tpu.memory_space<vmem>>, vector<32x32xf32>
    %cst_58 = arith.constant dense<0.000000e+00> : vector<8x32xf32>
    %171 = tpu.matmul %169, %170, %cst_58 {dimension_numbers = #tpu.dot_dimension_numbers<[1], [0], [0], [1], [0, 0, 1, 1], [], []>} : vector<8x32xf32>, vector<32x32xf32>, vector<8x32xf32> -> vector<8x32xf32>
    %c0_59 = arith.constant 0 : index
    %c0_60 = arith.constant 0 : index
    %172 = vector.load %arg8[%c0_59, %c0_60] : memref<1x32xf32, #tpu.memory_space<vmem>>, vector<1x32xf32>
    %173 = vector.broadcast %172 : vector<1x32xf32> to vector<8x32xf32>
    %174 = arith.addf %171, %173 : vector<8x32xf32>
    %c0_61 = arith.constant 0 : index
    %c0_62 = arith.constant 0 : index
    %c0_63 = arith.constant 0 : index
    %175 = vector.load %arg9[%c0_61, %c0_62, %c0_63] : memref<1x8x32xf32, #tpu.memory_space<vmem>>, vector<1x8x32xf32>
    %176 = vector.shape_cast %175 : vector<1x8x32xf32> to vector<8x32xf32>
    %177 = vector.shape_cast %174 : vector<8x32xf32> to vector<1x8x32xf32>
    tpu.vector_store %arg9[%c0_61, %c0_62, %c0_63], %177 {strides = array<i32>} : memref<1x8x32xf32, #tpu.memory_space<vmem>>, vector<1x8x32xf32>,
    return
  }
  func.func @transform_0(%arg0: i32, %arg1: i32) -> (i32, i32, i32) {
    %c0_i32 = arith.constant 0 : i32
    %c0_i32_0 = arith.constant 0 : i32
    return %arg0, %arg1, %c0_i32 : i32, i32, i32
  }
  func.func @transform_1(%arg0: i32, %arg1: i32) -> (i32, i32, i32) {
    %c0_i32 = arith.constant 0 : i32
    %c0_i32_0 = arith.constant 0 : i32
    %c0_i32_1 = arith.constant 0 : i32
    return %arg0, %c0_i32, %c0_i32_0 : i32, i32, i32
  }
  func.func @transform_2(%arg0: i32, %arg1: i32) -> (i32, i32) {
    %c0_i32 = arith.constant 0 : i32
    %c0_i32_0 = arith.constant 0 : i32
    %c0_i32_1 = arith.constant 0 : i32
    return %c0_i32, %c0_i32_0 : i32, i32
  }
  func.func @transform_3(%arg0: i32, %arg1: i32) -> (i32, i32) {
    %c0_i32 = arith.constant 0 : i32
    %c0_i32_0 = arith.constant 0 : i32
    %c0_i32_1 = arith.constant 0 : i32
    return %c0_i32, %c0_i32_0 : i32, i32
  }
  func.func @transform_4(%arg0: i32, %arg1: i32) -> (i32, i32) {
    %c0_i32 = arith.constant 0 : i32
    %c0_i32_0 = arith.constant 0 : i32
    %c0_i32_1 = arith.constant 0 : i32
    return %c0_i32, %c0_i32_0 : i32, i32
  }
  func.func @transform_5(%arg0: i32, %arg1: i32) -> (i32, i32) {
    %c0_i32 = arith.constant 0 : i32
    %c0_i32_0 = arith.constant 0 : i32
    %c0_i32_1 = arith.constant 0 : i32
    return %c0_i32, %c0_i32_0 : i32, i32
  }
  func.func @transform_6(%arg0: i32, %arg1: i32) -> (i32, i32) {
    %c0_i32 = arith.constant 0 : i32
    %c0_i32_0 = arith.constant 0 : i32
    %c0_i32_1 = arith.constant 0 : i32
    return %c0_i32, %c0_i32_0 : i32, i32
  }
  func.func @transform_7(%arg0: i32, %arg1: i32) -> (i32, i32, i32) {
    %c0_i32 = arith.constant 0 : i32
    %c0_i32_0 = arith.constant 0 : i32
    return %arg0, %arg1, %c0_i32 : i32, i32, i32
  }
}

</mosaic_0001>

<llo_original>
// kernel: tpu_custom_call.1
$region0: #{tpu_custom_call.1}
  #allocation0 [shape = 'u32[]', space=smem, size = 0x4, offset = 0x4, fixed_abs, tag = 'smem constant byte address 0x4 - core index']
  #allocation1 [shape = 'u32[144,128]{1,0:T(1,128)}', space=vmem, size = 0x12000, scoped, tag = 'internal scratch']
  #allocation2 [shape = 'f32[8,32]{1,0:T(8,128)}', space=vmem, size = 0x1000, scoped, tag = 'scratch operand']
  #allocation3 [shape = 'f32[8,32]{1,0:T(8,128)}', space=vmem, size = 0x1000, scoped, tag = 'scratch operand']
  %s0 = inlined_call_operand.hbm [shape: f32[2,8,32], index: 0, kind: input, shape index: {}]
  %s1 = inlined_call_operand.hbm [shape: f32[2,8,32], index: 1, kind: input, shape index: {}]
  %s2 = inlined_call_operand.hbm [shape: f32[32,32], index: 2, kind: input, shape index: {}]
  %s3 = inlined_call_operand.hbm [shape: f32[32,32], index: 3, kind: input, shape index: {}]
  %s4 = inlined_call_operand.hbm [shape: f32[32,32], index: 4, kind: input, shape index: {}]
  %s5 = inlined_call_operand.hbm [shape: f32[32,32], index: 5, kind: input, shape index: {}]
  %s6 = inlined_call_operand.vmem [shape: f32[1,32], index: 6, kind: input, shape index: {}]
  %s7 = inlined_call_operand.hbm [shape: f32[2,8,32], index: 7, kind: output, shape index: {}]
  %s8 = sld [smem:[#allocation0]]
  $region117: #{tpu_custom_call.1} parent=0
    _
  %s10 = ssub.s32 1, %s8
  %s11 = scalar_select 0, %s10, %s8
  $region1: #{tpu_custom_call.1} parent=0
    #allocation4 [shape = 'u8[8192]{0}', space=vmem, size = 0x2000, scoped, tag = 'input window, operand 0']
    #allocation5 [shape = 's32[2]{0}', space=sflag, size = 0x8, scoped, tag = 'scoped memory for tpu_custom_call.1']
    #allocation6 [shape = 's32[2]{0}', space=sflag, size = 0x8, scoped, tag = 'scoped memory for tpu_custom_call.1']
    #allocation7 [shape = 'u8[8192]{0}', space=vmem, size = 0x2000, scoped, tag = 'input window, operand 1']
    #allocation8 [shape = 's32[2]{0}', space=sflag, size = 0x8, scoped, tag = 'scoped memory for tpu_custom_call.1']
    #allocation9 [shape = 'u8[16384]{0}', space=vmem, size = 0x4000, scoped, tag = 'input window, operand 2, single buffered']
    #allocation10 [shape = 'u8[16384]{0}', space=vmem, size = 0x4000, scoped, tag = 'input window, operand 3, single buffered']
    #allocation11 [shape = 's32[1]{0}', space=sflag, size = 0x4, scoped, tag = 'scoped memory for tpu_custom_call.1']
    #allocation12 [shape = 'u8[16384]{0}', space=vmem, size = 0x4000, scoped, tag = 'input window, operand 4, single buffered']
    #allocation13 [shape = 'u8[16384]{0}', space=vmem, size = 0x4000, scoped, tag = 'input window, operand 5, single buffered']
    #allocation14 [shape = 's32[1]{0}', space=sflag, size = 0x4, scoped, tag = 'scoped memory for tpu_custom_call.1']
    #allocation15 [shape = 'u8[8192]{0}', space=vmem, size = 0x2000, scoped, tag = 'output window, operand 0']
    %12 = vsyncpa [#allocation5], 0
    %s13 = scalar_lea.sflag [#allocation5], 1
    %14 = vsyncpa %s13, 0
    %15 = vsyncpa [#allocation8], 0
    %s16 = scalar_lea.sflag [#allocation8], 1
    %17 = vsyncpa %s16, 0
    %18 = vsyncpa [#allocation11], 0
    %19 = vsyncpa [#allocation14], 0
    %20 = vsyncpa [#allocation6], 0
    %s21 = scalar_lea.sflag [#allocation6], 1
    %22 = vsyncpa %s21, 0
    loop: start=0, step=1, limit=4
    $region2: #{tpu_custom_call.1} parent=1 // loop_pre_header
      _
    $region3: #{tpu_custom_call.1} parent=1 // loop_header
      %s24 = sphi 0, %s28
      %p25 = scmp.ge.s32.totalorder %s24, 4
      %s31 = sphi 0, %s43
      %s32 = sphi 0, %s39
      %s33 = sphi 0, %s31
      %s34 = sphi 0, %s32
      %s35 = sphi 0, %s33
      %s36 = sphi 0, %s34
      %s48 = sphi 0, %s50
      %s51 = sphi 0, %s48
      %s52 = sphi 0, %s51
      %s68 = sphi 0, %s52
      %s74 = sphi 0, %s76
      %s77 = sphi 0, %s74
      %s78 = sphi 0, %s77
      %s94 = sphi 0, %s78
      %s98 = sphi 0, %s98
      %s100 = sphi 0, %s98
      %s101 = sphi 0, %s100
      %s115 = sphi 0, %s101
      %s119 = sphi 0, %s119
      %s121 = sphi 0, %s119
      %s122 = sphi 0, %s121
      %s136 = sphi 0, %s122
      %s140 = sphi 0, %s140
      %s142 = sphi 0, %s140
      %s143 = sphi 0, %s142
      %s157 = sphi 0, %s143
      %s161 = sphi 0, %s161
      %s163 = sphi 0, %s161
      %s164 = sphi 0, %s163
      %s178 = sphi 0, %s164
      %s182 = sphi 0, %s182
      %s184 = sphi 0, %s182
      %s185 = sphi 0, %s184
      %s199 = sphi 0, %s185
      %s207 = sphi 0, %s209
      %s210 = sphi 0, %s207
      %s211 = sphi 0, %s210
      %s227 = sphi 0, %s211
    $region4: #{tpu_custom_call.1} parent=1 // loop_header_branch
      %27 = sbr.rel (%p25) target = $region8
    $region5: #{tpu_custom_call.1} parent=1 // loop_body
      %s29 = ssub.s32 %s24, 1
      %s30 = ssub.s32 %s24, 2
      %s37 = sadd.s32 1, %s32
      %p38 = scmp.ge.s32.totalorder %s37, 1
      %s39 = scalar_select %p38, 0, %s37
      %s40 = sadd.s32 1, %s31
      %s41 = scalar_select %p38, %s40, %s31
      %p42 = scmp.ge.s32.totalorder %s41, 2
      %s43 = scalar_select %p42, 0, %s41
      %s44 = ssub.s32 %s31, %s43
      %s45 = ssub.s32 %s32, %s39
      %s46 = sor.u32 %s44, %s45
      %p47 = scmp.eq.s32.totalorder %s46, 0
      %s49 = sadd.s32 %s48, 1
      %s50 = scalar_select %p47, %s48, %s49
      %p53 = pneg %p47
      %p54 = scmp.eq.s32.totalorder %s24, 1
      %p55 = por %p53, %p54
      %p56 = scmp.ne.s32.totalorder %s48, %s51
      %p57 = scmp.eq.s32.totalorder %s24, 0
      %p58 = por %p56, %p57
      %p59 = scmp.ne.s32.totalorder %s48, %s51
      %p60 = scmp.eq.s32.totalorder %s29, 1
      %p61 = por %p59, %p60
      %p62 = scmp.ne.s32.totalorder %s51, %s52
      %p63 = scmp.eq.s32.totalorder %s29, 0
      %p64 = por %p62, %p63
      %p65 = scmp.ne.s32.totalorder %s51, %s52
      %p66 = scmp.eq.s32.totalorder %s30, 1
      %p67 = por %p65, %p66
      %p69 = scmp.ne.s32.totalorder %s52, %s68
      %p70 = scmp.eq.s32.totalorder %s30, 0
      %p71 = por %p69, %p70
      %s72 = ssub.s32 %s31, %s43
      %p73 = scmp.eq.s32.totalorder %s72, 0
      %s75 = sadd.s32 %s74, 1
      %s76 = scalar_select %p73, %s74, %s75
      %p79 = pneg %p73
      %p80 = scmp.eq.s32.totalorder %s24, 1
      %p81 = por %p79, %p80
      %p82 = scmp.ne.s32.totalorder %s74, %s77
      %p83 = scmp.eq.s32.totalorder %s24, 0
      %p84 = por %p82, %p83
      %p85 = scmp.ne.s32.totalorder %s74, %s77
      %p86 = scmp.eq.s32.totalorder %s29, 1
      %p87 = por %p85, %p86
      %p88 = scmp.ne.s32.totalorder %s77, %s78
      %p89 = scmp.eq.s32.totalorder %s29, 0
      %p90 = por %p88, %p89
      %p91 = scmp.ne.s32.totalorder %s77, %s78
      %p92 = scmp.eq.s32.totalorder %s30, 1
      %p93 = por %p91, %p92
      %p95 = scmp.ne.s32.totalorder %s78, %s94
      %p96 = scmp.eq.s32.totalorder %s30, 0
      %p97 = por %p95, %p96
      %s99 = sadd.s32 %s98, 1
      %p102 = scmp.eq.s32.totalorder %s24, 1
      %p103 = scmp.ne.s32.totalorder %s98, %s100
      %p104 = scmp.eq.s32.totalorder %s24, 0
      %p105 = por %p103, %p104
      %p106 = scmp.ne.s32.totalorder %s98, %s100
      %p107 = scmp.eq.s32.totalorder %s29, 1
      %p108 = por %p106, %p107
      %p109 = scmp.ne.s32.totalorder %s100, %s101
      %p110 = scmp.eq.s32.totalorder %s29, 0
      %p111 = por %p109, %p110
      %p112 = scmp.ne.s32.totalorder %s100, %s101
      %p113 = scmp.eq.s32.totalorder %s30, 1
      %p114 = por %p112, %p113
      %p116 = scmp.ne.s32.totalorder %s101, %s115
      %p117 = scmp.eq.s32.totalorder %s30, 0
      %p118 = por %p116, %p117
      %s120 = sadd.s32 %s119, 1
      %p123 = scmp.eq.s32.totalorder %s24, 1
      %p124 = scmp.ne.s32.totalorder %s119, %s121
      %p125 = scmp.eq.s32.totalorder %s24, 0
      %p126 = por %p124, %p125
      %p127 = scmp.ne.s32.totalorder %s119, %s121
      %p128 = scmp.eq.s32.totalorder %s29, 1
      %p129 = por %p127, %p128
      %p130 = scmp.ne.s32.totalorder %s121, %s122
      %p131 = scmp.eq.s32.totalorder %s29, 0
      %p132 = por %p130, %p131
      %p133 = scmp.ne.s32.totalorder %s121, %s122
      %p134 = scmp.eq.s32.totalorder %s30, 1
      %p135 = por %p133, %p134
      %p137 = scmp.ne.s32.totalorder %s122, %s136
      %p138 = scmp.eq.s32.totalorder %s30, 0
      %p139 = por %p137, %p138
      %s141 = sadd.s32 %s140, 1
      %p144 = scmp.eq.s32.totalorder %s24, 1
      %p145 = scmp.ne.s32.totalorder %s140, %s142
      %p146 = scmp.eq.s32.totalorder %s24, 0
      %p147 = por %p145, %p146
      %p148 = scmp.ne.s32.totalorder %s140, %s142
      %p149 = scmp.eq.s32.totalorder %s29, 1
      %p150 = por %p148, %p149
      %p151 = scmp.ne.s32.totalorder %s142, %s143
      %p152 = scmp.eq.s32.totalorder %s29, 0
      %p153 = por %p151, %p152
      %p154 = scmp.ne.s32.totalorder %s142, %s143
      %p155 = scmp.eq.s32.totalorder %s30, 1
      %p156 = por %p154, %p155
      %p158 = scmp.ne.s32.totalorder %s143, %s157
      %p159 = scmp.eq.s32.totalorder %s30, 0
      %p160 = por %p158, %p159
      %s162 = sadd.s32 %s161, 1
      %p165 = scmp.eq.s32.totalorder %s24, 1
      %p166 = scmp.ne.s32.totalorder %s161, %s163
      %p167 = scmp.eq.s32.totalorder %s24, 0
      %p168 = por %p166, %p167
      %p169 = scmp.ne.s32.totalorder %s161, %s163
      %p170 = scmp.eq.s32.totalorder %s29, 1
      %p171 = por %p169, %p170
      %p172 = scmp.ne.s32.totalorder %s163, %s164
      %p173 = scmp.eq.s32.totalorder %s29, 0
      %p174 = por %p172, %p173
      %p175 = scmp.ne.s32.totalorder %s163, %s164
      %p176 = scmp.eq.s32.totalorder %s30, 1
      %p177 = por %p175, %p176
      %p179 = scmp.ne.s32.totalorder %s164, %s178
      %p180 = scmp.eq.s32.totalorder %s30, 0
      %p181 = por %p179, %p180
      %s183 = sadd.s32 %s182, 1
      %p186 = scmp.eq.s32.totalorder %s24, 1
      %p187 = scmp.ne.s32.totalorder %s182, %s184
      %p188 = scmp.eq.s32.totalorder %s24, 0
      %p189 = por %p187, %p188
      %p190 = scmp.ne.s32.totalorder %s182, %s184
      %p191 = scmp.eq.s32.totalorder %s29, 1
      %p192 = por %p190, %p191
      %p193 = scmp.ne.s32.totalorder %s184, %s185
      %p194 = scmp.eq.s32.totalorder %s29, 0
      %p195 = por %p193, %p194
      %p196 = scmp.ne.s32.totalorder %s184, %s185
      %p197 = scmp.eq.s32.totalorder %s30, 1
      %p198 = por %p196, %p197
      %p200 = scmp.ne.s32.totalorder %s185, %s199
      %p201 = scmp.eq.s32.totalorder %s30, 0
      %p202 = por %p200, %p201
      %s203 = ssub.s32 %s31, %s43
      %s204 = ssub.s32 %s32, %s39
      %s205 = sor.u32 %s203, %s204
      %p206 = scmp.eq.s32.totalorder %s205, 0
      %s208 = sadd.s32 %s207, 1
      %s209 = scalar_select %p206, %s207, %s208
      %p212 = pneg %p206
      %p213 = scmp.eq.s32.totalorder %s24, 1
      %p214 = por %p212, %p213
      %p215 = scmp.ne.s32.totalorder %s207, %s210
      %p216 = scmp.eq.s32.totalorder %s24, 0
      %p217 = por %p215, %p216
      %p218 = scmp.ne.s32.totalorder %s207, %s210
      %p219 = scmp.eq.s32.totalorder %s29, 1
      %p220 = por %p218, %p219
      %p221 = scmp.ne.s32.totalorder %s210, %s211
      %p222 = scmp.eq.s32.totalorder %s29, 0
      %p223 = por %p221, %p222
      %p224 = scmp.ne.s32.totalorder %s210, %s211
      %p225 = scmp.eq.s32.totalorder %s30, 1
      %p226 = por %p224, %p225
      %p228 = scmp.ne.s32.totalorder %s211, %s227
      %p229 = scmp.eq.s32.totalorder %s30, 0
      %p230 = por %p228, %p229
      %p231 = scmp.le.s32.totalorder 1, %s24
      %p232 = scmp.lt.s32.totalorder %s24, 3
      %p233 = pnand %p231, %p232
      %p234 = pneg %p233
      // Predicated region
      $region9: #{tpu_custom_call.1} parent=5 // pred_check
        _
      $region10: #{tpu_custom_call.1} parent=5 // pred_check_branch
        %236 = sbr.rel (%p233) target = $region12
      $region11: #{tpu_custom_call.1} parent=5 // pred_region
        %s237 = ssub.s32 %s24, 1
        // Predicated region
        $region13: #{tpu_custom_call.1} parent=11 // pred_check
          %p238 = pneg %p111
        $region14: #{tpu_custom_call.1} parent=11 // pred_check_branch
          %240 = sbr.rel (%p238) target = $region16
        $region15: #{tpu_custom_call.1} parent=11 // pred_region
          %s242 = ssub.s32 512, 512
          %243 = vsyncadd [#allocation8], %s242
          %s244 = sshll.u32 [#allocation9], 4
          %s245 = int_to_ptr.vmem [resolvable:$true] %s244
          %250 = dma.hbm_to_vmem [thread:$0]  %s2, 512, %s245, [#allocation8], 128, 128, 8
        $region16: #{tpu_custom_call.1} parent=11 // pred_fallthru
          _
        // Predicated region
        $region17: #{tpu_custom_call.1} parent=11 // pred_check
          %p251 = pneg %p132
        $region18: #{tpu_custom_call.1} parent=11 // pred_check_branch
          %253 = sbr.rel (%p251) target = $region20
        $region19: #{tpu_custom_call.1} parent=11 // pred_region
          %s255 = ssub.s32 512, 512
          %256 = vsyncadd [#allocation11], %s255
          %s257 = sshll.u32 [#allocation10], 4
          %s258 = int_to_ptr.vmem [resolvable:$true] %s257
          %263 = dma.hbm_to_vmem [thread:$0]  %s3, 512, %s258, [#allocation11], 128, 128, 8
        $region20: #{tpu_custom_call.1} parent=11 // pred_fallthru
          _
        // Predicated region
        $region21: #{tpu_custom_call.1} parent=11 // pred_check
          %p264 = pneg %p153
        $region22: #{tpu_custom_call.1} parent=11 // pred_check_branch
          %266 = sbr.rel (%p264) target = $region24
        $region23: #{tpu_custom_call.1} parent=11 // pred_region
          %s268 = ssub.s32 512, 512
          %269 = vsyncadd [#allocation11], %s268
          %s270 = sshll.u32 [#allocation12], 4
          %s271 = int_to_ptr.vmem [resolvable:$true] %s270
          %276 = dma.hbm_to_vmem [thread:$0]  %s4, 512, %s271, [#allocation11], 128, 128, 8
        $region24: #{tpu_custom_call.1} parent=11 // pred_fallthru
          _
        // Predicated region
        $region25: #{tpu_custom_call.1} parent=11 // pred_check
          %p277 = pneg %p174
        $region26: #{tpu_custom_call.1} parent=11 // pred_check_branch
          %279 = sbr.rel (%p277) target = $region28
        $region27: #{tpu_custom_call.1} parent=11 // pred_region
          %s281 = ssub.s32 512, 512
          %282 = vsyncadd [#allocation14], %s281
          %s283 = sshll.u32 [#allocation13], 4
          %s284 = int_to_ptr.vmem [resolvable:$true] %s283
          %289 = dma.hbm_to_vmem [thread:$0]  %s5, 512, %s284, [#allocation14], 128, 128, 8
        $region28: #{tpu_custom_call.1} parent=11 // pred_fallthru
          _
        // Predicated region
        $region29: #{tpu_custom_call.1} parent=11 // pred_check
          %p290 = pneg %p195
        $region30: #{tpu_custom_call.1} parent=11 // pred_check_branch
          %292 = sbr.rel (%p290) target = $region32
        $region31: #{tpu_custom_call.1} parent=11 // pred_region
          _
        $region32: #{tpu_custom_call.1} parent=11 // pred_fallthru
          _
      $region12: #{tpu_custom_call.1} parent=5 // pred_fallthru
        _
      %p293 = scmp.lt.s32.totalorder %s24, 2
      // Predicated region
      $region33: #{tpu_custom_call.1} parent=5 // pred_check
        %p294 = pneg %p293
      $region34: #{tpu_custom_call.1} parent=5 // pred_check_branch
        %296 = sbr.rel (%p294) target = $region36
      $region35: #{tpu_custom_call.1} parent=5 // pred_region
        // Predicated region
        $region37: #{tpu_custom_call.1} parent=35 // pred_check
          %p297 = pneg %p58
        $region38: #{tpu_custom_call.1} parent=35 // pred_check_branch
          %299 = sbr.rel (%p297) target = $region40
        $region39: #{tpu_custom_call.1} parent=35 // pred_region
          %s300 = sand.u32 %s48, 1
          %s301 = scalar_lea.sflag [#allocation5], %s300
          %s302 = sand.u32 %s48, 1
          %s303 = smul.addr %s302, 8
          %s304 = scalar_lea.vmem [#allocation4], %s303
          %s306 = ssub.s32 128, 128
          %307 = vsyncadd %s301, %s306
          %s308 = sadd.s32 %s32, %s31
          %s309 = smul.addr %s308, 128
          %s310 = scalar_lea.hbm %s0, %s309
          %s312 = sshll.u32 %s304, 4
          %s313 = int_to_ptr.vmem [resolvable:$true] %s312
          %315 = dma.hbm_to_vmem [thread:$0]  %s310, 128, %s313, %s301
        $region40: #{tpu_custom_call.1} parent=35 // pred_fallthru
          _
        // Predicated region
        $region41: #{tpu_custom_call.1} parent=35 // pred_check
          %p316 = pneg %p84
        $region42: #{tpu_custom_call.1} parent=35 // pred_check_branch
          %318 = sbr.rel (%p316) target = $region44
        $region43: #{tpu_custom_call.1} parent=35 // pred_region
          %s319 = sand.u32 %s24, 1
          %s320 = scalar_lea.sflag [#allocation8], %s319
          %s321 = sand.u32 %s74, 1
          %s322 = smul.addr %s321, 8
          %s323 = scalar_lea.vmem [#allocation7], %s322
          %s325 = ssub.s32 128, 128
          %326 = vsyncadd %s320, %s325
          %s327 = smul.addr %s31, 128
          %s328 = scalar_lea.hbm %s1, %s327
          %s330 = sshll.u32 %s323, 4
          %s331 = int_to_ptr.vmem [resolvable:$true] %s330
          %333 = dma.hbm_to_vmem [thread:$0]  %s328, 128, %s331, %s320
        $region44: #{tpu_custom_call.1} parent=35 // pred_fallthru
          _
      $region36: #{tpu_custom_call.1} parent=5 // pred_fallthru
        _
      %p334 = scmp.le.s32.totalorder 1, %s24
      %p335 = scmp.lt.s32.totalorder %s24, 3
      %p336 = pnand %p334, %p335
      %p337 = pneg %p336
      // Predicated region
      $region45: #{tpu_custom_call.1} parent=5 // pred_check
        _
      $region46: #{tpu_custom_call.1} parent=5 // pred_check_branch
        %339 = sbr.rel (%p336) target = $region48
      $region47: #{tpu_custom_call.1} parent=5 // pred_region
        %s340 = ssub.s32 %s24, 1
        %s341 = sand.u32 %s51, 1
        %s342 = scalar_lea.sflag [#allocation5], %s341
        %s343 = sand.u32 %s51, 1
        %s344 = smul.addr %s343, 8
        %s345 = scalar_lea.vmem [#allocation4], %s344
        // Predicated region
        $region49: #{tpu_custom_call.1} parent=47 // pred_check
          %p346 = pneg %p64
        $region50: #{tpu_custom_call.1} parent=47 // pred_check_branch
          %348 = sbr.rel (%p346) target = $region52
        $region51: #{tpu_custom_call.1} parent=47 // pred_region
          %349 = dma.done %s342, 128
        $region52: #{tpu_custom_call.1} parent=47 // pred_fallthru
          _
        %s350 = sand.u32 %s29, 1
        %s351 = scalar_lea.sflag [#allocation8], %s350
        %s352 = sand.u32 %s77, 1
        %s353 = smul.addr %s352, 8
        %s354 = scalar_lea.vmem [#allocation7], %s353
        // Predicated region
        $region53: #{tpu_custom_call.1} parent=47 // pred_check
          %p355 = pneg %p90
        $region54: #{tpu_custom_call.1} parent=47 // pred_check_branch
          %357 = sbr.rel (%p355) target = $region56
        $region55: #{tpu_custom_call.1} parent=47 // pred_region
          %358 = dma.done %s351, 128
        $region56: #{tpu_custom_call.1} parent=47 // pred_fallthru
          _
        // Predicated region
        $region57: #{tpu_custom_call.1} parent=47 // pred_check
          %p359 = pneg %p111
        $region58: #{tpu_custom_call.1} parent=47 // pred_check_branch
          %361 = sbr.rel (%p359) target = $region60
        $region59: #{tpu_custom_call.1} parent=47 // pred_region
          %362 = dma.done [#allocation8], 512
        $region60: #{tpu_custom_call.1} parent=47 // pred_fallthru
          _
        // Predicated region
        $region61: #{tpu_custom_call.1} parent=47 // pred_check
          %p363 = pneg %p132
        $region62: #{tpu_custom_call.1} parent=47 // pred_check_branch
          %365 = sbr.rel (%p363) target = $region64
        $region63: #{tpu_custom_call.1} parent=47 // pred_region
          %366 = dma.done [#allocation11], 512
        $region64: #{tpu_custom_call.1} parent=47 // pred_fallthru
          _
        // Predicated region
        $region65: #{tpu_custom_call.1} parent=47 // pred_check
          %p367 = pneg %p153
        $region66: #{tpu_custom_call.1} parent=47 // pred_check_branch
          %369 = sbr.rel (%p367) target = $region68
        $region67: #{tpu_custom_call.1} parent=47 // pred_region
          %370 = dma.done [#allocation11], 512
        $region68: #{tpu_custom_call.1} parent=47 // pred_fallthru
          _
        // Predicated region
        $region69: #{tpu_custom_call.1} parent=47 // pred_check
          %p371 = pneg %p174
        $region70: #{tpu_custom_call.1} parent=47 // pred_check_branch
          %373 = sbr.rel (%p371) target = $region72
        $region71: #{tpu_custom_call.1} parent=47 // pred_region
          %374 = dma.done [#allocation14], 512
        $region72: #{tpu_custom_call.1} parent=47 // pred_fallthru
          _
        %s375 = sand.u32 %s51, 1
        %s376 = scalar_lea.sflag [#allocation5], %s375
        %s377 = sand.u32 %s51, 1
        %s378 = smul.addr %s377, 8
        %s379 = scalar_lea.vmem [#allocation4], %s378
        %p380 = pneg %p64
        %p381 = pneg %p61
        %s382 = sand.u32 %s29, 1
        %s383 = scalar_lea.sflag [#allocation8], %s382
        %s384 = sand.u32 %s77, 1
        %s385 = smul.addr %s384, 8
        %s386 = scalar_lea.vmem [#allocation7], %s385
        %p387 = pneg %p90
        %p388 = pneg %p87
        %p389 = pneg %p111
        %p390 = pneg %p108
        %p391 = pneg %p132
        %p392 = pneg %p129
        %p393 = pneg %p153
        %p394 = pneg %p150
        %p395 = pneg %p174
        %p396 = pneg %p171
        %p397 = pneg %p195
        %p398 = pneg %p192
        %p399 = pneg %p223
        %p400 = pneg %p220
        %s401 = sand.u32 %s210, 1
        %s402 = scalar_lea.sflag [#allocation6], %s401
        %s403 = sand.u32 %s210, 1
        %s404 = smul.addr %s403, 8
        %s405 = scalar_lea.vmem [#allocation15], %s404
        %p406 = scmp.eq.s32.totalorder %s34, 0
        // Predicated region
        $region73: #{tpu_custom_call.1} parent=47 // pred_check
          %p407 = pneg %p406
        $region74: #{tpu_custom_call.1} parent=47 // pred_check_branch
          %409 = sbr.rel (%p407) target = $region76
        $region75: #{tpu_custom_call.1} parent=47 // pred_region
          %v410 = vld [vmem:[%s354] sm:$0xff]
          %v411 = vld [vmem:[#allocation10] sm:$0xff]
          %v412 = vld [vmem:[#allocation10 + $0x8] sm:$0xff]
          %v413 = vld [vmem:[#allocation10 + $0x10] sm:$0xff]
          %v414 = vld [vmem:[#allocation10 + $0x18] sm:$0xff]
          %vm415 = vcmask 261120
          %v417 = vsel %vm415, %v410, 0
          %419 = vmatprep.subr.mxu0 0.0
          %420 = vmatpush1.msra.mxu0 %v411
          %421 = vmatprep.subr.mxu0 0.0
          %422 = vmatpush1.msra.mxu0 %v412
          %423 = vmatprep.subr.mxu0 0.0
          %424 = vmatpush1.msra.mxu0 %v413
          %425 = vmatprep.subr.mxu0 0.0
          %426 = vmatpush1.msra.mxu0 %v414
          %427 = vmatprep.subr.mxu0 0.0
          %428 = vmatpush1.msra.mxu0 0.0
          %429 = vmatprep.subr.mxu0 0.0
          %430 = vmatpush1.msra.mxu0 0.0
          %431 = vmatprep.subr.mxu0 0.0
          %432 = vmatpush1.msra.mxu0 0.0
          %433 = vmatprep.subr.mxu0 0.0
          %434 = vmatpush1.msra.mxu0 0.0
          %435 = vmatprep.subr.mxu0 0.0
          %436 = vmatpush1.msra.mxu0 0.0
          %437 = vmatprep.subr.mxu0 0.0
          %438 = vmatpush1.msra.mxu0 0.0
          %439 = vmatprep.subr.mxu0 0.0
          %440 = vmatpush1.msra.mxu0 0.0
          %441 = vmatprep.subr.mxu0 0.0
          %442 = vmatpush1.msra.mxu0 0.0
          %443 = vmatprep.subr.mxu0 0.0
          %444 = vmatpush1.msra.mxu0 0.0
          %445 = vmatprep.subr.mxu0 0.0
          %446 = vmatpush1.msra.mxu0 0.0
          %447 = vmatprep.subr.mxu0 0.0
          %448 = vmatpush1.msra.mxu0 0.0
          %449 = vmatprep.subr.mxu0 0.0
          %450 = vmatpush1.msra.mxu0 0.0
          %451 = vmatprep.subr.mxu0 0.0
          %452 = vmatpush1.msra.mxu0 0.0
          %453 = vmatprep.subr.mxu0 0.0
          %454 = vmatpush1.msra.mxu0 0.0
          %455 = vmatprep.subr.mxu0 0.0
          %456 = vmatpush1.msra.mxu0 0.0
          %457 = vmatprep.subr.mxu0 0.0
          %458 = vmatpush1.msra.mxu0 0.0
          %459 = vmatprep.subr.mxu0 0.0
          %460 = vmatpush1.msra.mxu0 0.0
          %461 = vmatprep.subr.mxu0 0.0
          %462 = vmatpush1.msra.mxu0 0.0
          %463 = vmatprep.subr.mxu0 0.0
          %464 = vmatpush1.msra.mxu0 0.0
          %465 = vmatprep.subr.mxu0 0.0
          %466 = vmatpush1.msra.mxu0 0.0
          %467 = vmatprep.subr.mxu0 0.0
          %468 = vmatpush1.msra.mxu0 0.0
          %469 = vmatprep.subr.mxu0 0.0
          %470 = vmatpush1.msra.mxu0 0.0
          %471 = vmatprep.subr.mxu0 0.0
          %472 = vmatpush1.msra.mxu0 0.0
          %473 = vmatprep.subr.mxu0 0.0
          %474 = vmatpush1.msra.mxu0 0.0
          %475 = vmatprep.subr.mxu0 0.0
          %476 = vmatpush1.msra.mxu0 0.0
          %477 = vmatprep.subr.mxu0 0.0
          %478 = vmatpush1.msra.mxu0 0.0
          %479 = vmatprep.subr.mxu0 0.0
          %480 = vmatpush1.msra.mxu0 0.0
          %481 = vmatprep.subr.mxu0 0.0
          %482 = vmatpush1.msra.mxu0 0.0
          %483 = vmatprep.mubr.f32.mxu0 0.0
          %484 = vmatmul.mubr.f32.gmra.mrb[0].mxu0 %v417
          %v485 = vpop.f32.mrb[0].mxu0
          %v486 = vadd.f32 0.0, %v485
          %v487 = vpop.f32.mrb[0].mxu0
          %488 = vdwg.mxu0
          %489 = vst.msk [vmem:[#allocation2] sm:$0xff] %vm415, %v486
          %v490 = vld [vmem:[#allocation12] sm:$0xff]
          %v491 = vld [vmem:[#allocation12 + $0x8] sm:$0xff]
          %v492 = vld [vmem:[#allocation12 + $0x10] sm:$0xff]
          %v493 = vld [vmem:[#allocation12 + $0x18] sm:$0xff]
          %494 = vmatprep.subr.mxu0 0.0
          %495 = vmatpush1.msra.mxu0 %v490
          %496 = vmatprep.subr.mxu0 0.0
          %497 = vmatpush1.msra.mxu0 %v491
          %498 = vmatprep.subr.mxu0 0.0
          %499 = vmatpush1.msra.mxu0 %v492
          %500 = vmatprep.subr.mxu0 0.0
          %501 = vmatpush1.msra.mxu0 %v493
          %502 = vmatprep.subr.mxu0 0.0
          %503 = vmatpush1.msra.mxu0 0.0
          %504 = vmatprep.subr.mxu0 0.0
          %505 = vmatpush1.msra.mxu0 0.0
          %506 = vmatprep.subr.mxu0 0.0
          %507 = vmatpush1.msra.mxu0 0.0
          %508 = vmatprep.subr.mxu0 0.0
          %509 = vmatpush1.msra.mxu0 0.0
          %510 = vmatprep.subr.mxu0 0.0
          %511 = vmatpush1.msra.mxu0 0.0
          %512 = vmatprep.subr.mxu0 0.0
          %513 = vmatpush1.msra.mxu0 0.0
          %514 = vmatprep.subr.mxu0 0.0
          %515 = vmatpush1.msra.mxu0 0.0
          %516 = vmatprep.subr.mxu0 0.0
          %517 = vmatpush1.msra.mxu0 0.0
          %518 = vmatprep.subr.mxu0 0.0
          %519 = vmatpush1.msra.mxu0 0.0
          %520 = vmatprep.subr.mxu0 0.0
          %521 = vmatpush1.msra.mxu0 0.0
          %522 = vmatprep.subr.mxu0 0.0
          %523 = vmatpush1.msra.mxu0 0.0
          %524 = vmatprep.subr.mxu0 0.0
          %525 = vmatpush1.msra.mxu0 0.0
          %526 = vmatprep.subr.mxu0 0.0
          %527 = vmatpush1.msra.mxu0 0.0
          %528 = vmatprep.subr.mxu0 0.0
          %529 = vmatpush1.msra.mxu0 0.0
          %530 = vmatprep.subr.mxu0 0.0
          %531 = vmatpush1.msra.mxu0 0.0
          %532 = vmatprep.subr.mxu0 0.0
          %533 = vmatpush1.msra.mxu0 0.0
          %534 = vmatprep.subr.mxu0 0.0
          %535 = vmatpush1.msra.mxu0 0.0
          %536 = vmatprep.subr.mxu0 0.0
          %537 = vmatpush1.msra.mxu0 0.0
          %538 = vmatprep.subr.mxu0 0.0
          %539 = vmatpush1.msra.mxu0 0.0
          %540 = vmatprep.subr.mxu0 0.0
          %541 = vmatpush1.msra.mxu0 0.0
          %542 = vmatprep.subr.mxu0 0.0
          %543 = vmatpush1.msra.mxu0 0.0
          %544 = vmatprep.subr.mxu0 0.0
          %545 = vmatpush1.msra.mxu0 0.0
          %546 = vmatprep.subr.mxu0 0.0
          %547 = vmatpush1.msra.mxu0 0.0
          %548 = vmatprep.subr.mxu0 0.0
          %549 = vmatpush1.msra.mxu0 0.0
          %550 = vmatprep.subr.mxu0 0.0
          %551 = vmatpush1.msra.mxu0 0.0
          %552 = vmatprep.subr.mxu0 0.0
          %553 = vmatpush1.msra.mxu0 0.0
          %554 = vmatprep.subr.mxu0 0.0
          %555 = vmatpush1.msra.mxu0 0.0
          %556 = vmatprep.subr.mxu0 0.0
          %557 = vmatpush1.msra.mxu0 0.0
          %558 = vmatprep.mubr.f32.mxu0 0.0
          %559 = vmatmul.mubr.f32.gmra.mrb[0].mxu0 %v417
          %v560 = vpop.f32.mrb[0].mxu0
          %v561 = vadd.f32 0.0, %v560
          %v562 = vpop.f32.mrb[0].mxu0
          %563 = vdwg.mxu0
          %564 = vst.msk [vmem:[#allocation3] sm:$0xff] %vm415, %v561
        $region76: #{tpu_custom_call.1} parent=47 // pred_fallthru
          _
        %v565 = vld [vmem:[%s345] sm:$0xff]
        %v566 = vld [vmem:[#allocation9] sm:$0xff]
        %v567 = vld [vmem:[#allocation9 + $0x8] sm:$0xff]
        %v568 = vld [vmem:[#allocation9 + $0x10] sm:$0xff]
        %v569 = vld [vmem:[#allocation9 + $0x18] sm:$0xff]
        %vm570 = vcmask 261120
        %v572 = vsel %vm570, %v565, 0
        %574 = vmatprep.subr.mxu0 0.0
        %575 = vmatpush1.msra.mxu0 %v566
        %576 = vmatprep.subr.mxu0 0.0
        %577 = vmatpush1.msra.mxu0 %v567
        %578 = vmatprep.subr.mxu0 0.0
        %579 = vmatpush1.msra.mxu0 %v568
        %580 = vmatprep.subr.mxu0 0.0
        %581 = vmatpush1.msra.mxu0 %v569
        %582 = vmatprep.subr.mxu0 0.0
        %583 = vmatpush1.msra.mxu0 0.0
        %584 = vmatprep.subr.mxu0 0.0
        %585 = vmatpush1.msra.mxu0 0.0
        %586 = vmatprep.subr.mxu0 0.0
        %587 = vmatpush1.msra.mxu0 0.0
        %588 = vmatprep.subr.mxu0 0.0
        %589 = vmatpush1.msra.mxu0 0.0
        %590 = vmatprep.subr.mxu0 0.0
        %591 = vmatpush1.msra.mxu0 0.0
        %592 = vmatprep.subr.mxu0 0.0
        %593 = vmatpush1.msra.mxu0 0.0
        %594 = vmatprep.subr.mxu0 0.0
        %595 = vmatpush1.msra.mxu0 0.0
        %596 = vmatprep.subr.mxu0 0.0
        %597 = vmatpush1.msra.mxu0 0.0
        %598 = vmatprep.subr.mxu0 0.0
        %599 = vmatpush1.msra.mxu0 0.0
        %600 = vmatprep.subr.mxu0 0.0
        %601 = vmatpush1.msra.mxu0 0.0
        %602 = vmatprep.subr.mxu0 0.0
        %603 = vmatpush1.msra.mxu0 0.0
        %604 = vmatprep.subr.mxu0 0.0
        %605 = vmatpush1.msra.mxu0 0.0
        %606 = vmatprep.subr.mxu0 0.0
        %607 = vmatpush1.msra.mxu0 0.0
        %608 = vmatprep.subr.mxu0 0.0
        %609 = vmatpush1.msra.mxu0 0.0
        %610 = vmatprep.subr.mxu0 0.0
        %611 = vmatpush1.msra.mxu0 0.0
        %612 = vmatprep.subr.mxu0 0.0
        %613 = vmatpush1.msra.mxu0 0.0
        %614 = vmatprep.subr.mxu0 0.0
        %615 = vmatpush1.msra.mxu0 0.0
        %616 = vmatprep.subr.mxu0 0.0
        %617 = vmatpush1.msra.mxu0 0.0
        %618 = vmatprep.subr.mxu0 0.0
        %619 = vmatpush1.msra.mxu0 0.0
        %620 = vmatprep.subr.mxu0 0.0
        %621 = vmatpush1.msra.mxu0 0.0
        %622 = vmatprep.subr.mxu0 0.0
        %623 = vmatpush1.msra.mxu0 0.0
        %624 = vmatprep.subr.mxu0 0.0
        %625 = vmatpush1.msra.mxu0 0.0
        %626 = vmatprep.subr.mxu0 0.0
        %627 = vmatpush1.msra.mxu0 0.0
        %628 = vmatprep.subr.mxu0 0.0
        %629 = vmatpush1.msra.mxu0 0.0
        %630 = vmatprep.subr.mxu0 0.0
        %631 = vmatpush1.msra.mxu0 0.0
        %632 = vmatprep.subr.mxu0 0.0
        %633 = vmatpush1.msra.mxu0 0.0
        %634 = vmatprep.subr.mxu0 0.0
        %635 = vmatpush1.msra.mxu0 0.0
        %636 = vmatprep.subr.mxu0 0.0
        %637 = vmatpush1.msra.mxu0 0.0
        %638 = vmatprep.mubr.f32.mxu0 0.0
        %639 = vmatmul.mubr.f32.gmra.mrb[0].mxu0 %v572
        %v640 = vpop.f32.mrb[0].mxu0
        %v641 = vadd.f32 0.0, %v640
        %v642 = vpop.f32.mrb[0].mxu0
        %643 = vdwg.mxu0
        %v644 = vmul.f32 %v641, 0.17677669
        // While loop
        $region77: #{tpu_custom_call.1} parent=47 // loop_pre_header
          _
        $region78: #{tpu_custom_call.1} parent=47 // loop_header
          %s646 = sphi 0, %s648
          %p647 = scmp.ge.s32.totalorder %s646, %s34
          %v651 = vphi -inf, %v739
          %v652 = vphi 0.0, %v750
          %v653 = vphi 0.0, %v825
        $region79: #{tpu_custom_call.1} parent=47 // loop_header_branch
          %650 = sbr.rel (%p647) target = $region83
        $region80: #{tpu_custom_call.1} parent=47 // loop_body
          %s654 = smul.u32 %s646, 8
          %s655 = scalar_lea.vmem [#allocation2], %s654
          %v656 = vld [vmem:[%s655] sm:$0xff]
          %s657 = scalar_lea.vmem [#allocation3], %s654
          %v658 = vld [vmem:[%s657] sm:$0xff]
          %vm659 = vcmask 64512
          %v661 = vsel %vm659, %v644, 0
          %v664 = vsel %vm659, %v656, 0
          %666 = vmatprep.subr.mxu0 0.0
          %667 = vmatpush1.xpose.msra.mxu0 %v664
          %668 = vmatprep.subr.mxu0 0.0
          %669 = vmatpush1.xpose.msra.mxu0 0.0
          %670 = vmatprep.subr.mxu0 0.0
          %671 = vmatpush1.xpose.msra.mxu0 0.0
          %672 = vmatprep.subr.mxu0 0.0
          %673 = vmatpush1.xpose.msra.mxu0 0.0
          %674 = vmatprep.subr.mxu0 0.0
          %675 = vmatpush1.xpose.msra.mxu0 0.0
          %676 = vmatprep.subr.mxu0 0.0
          %677 = vmatpush1.xpose.msra.mxu0 0.0
          %678 = vmatprep.subr.mxu0 0.0
          %679 = vmatpush1.xpose.msra.mxu0 0.0
          %680 = vmatprep.subr.mxu0 0.0
          %681 = vmatpush1.xpose.msra.mxu0 0.0
          %682 = vmatprep.subr.mxu0 0.0
          %683 = vmatpush1.xpose.msra.mxu0 0.0
          %684 = vmatprep.subr.mxu0 0.0
          %685 = vmatpush1.xpose.msra.mxu0 0.0
          %686 = vmatprep.subr.mxu0 0.0
          %687 = vmatpush1.xpose.msra.mxu0 0.0
          %688 = vmatprep.subr.mxu0 0.0
          %689 = vmatpush1.xpose.msra.mxu0 0.0
          %690 = vmatprep.subr.mxu0 0.0
          %691 = vmatpush1.xpose.msra.mxu0 0.0
          %692 = vmatprep.subr.mxu0 0.0
          %693 = vmatpush1.xpose.msra.mxu0 0.0
          %694 = vmatprep.subr.mxu0 0.0
          %695 = vmatpush1.xpose.msra.mxu0 0.0
          %696 = vmatprep.subr.mxu0 0.0
          %697 = vmatpush1.xpose.msra.mxu0 0.0
          %698 = vmatprep.subr.mxu0 0.0
          %699 = vmatpush1.xpose.msra.mxu0 0.0
          %700 = vmatprep.subr.mxu0 0.0
          %701 = vmatpush1.xpose.msra.mxu0 0.0
          %702 = vmatprep.subr.mxu0 0.0
          %703 = vmatpush1.xpose.msra.mxu0 0.0
          %704 = vmatprep.subr.mxu0 0.0
          %705 = vmatpush1.xpose.msra.mxu0 0.0
          %706 = vmatprep.subr.mxu0 0.0
          %707 = vmatpush1.xpose.msra.mxu0 0.0
          %708 = vmatprep.subr.mxu0 0.0
          %709 = vmatpush1.xpose.msra.mxu0 0.0
          %710 = vmatprep.subr.mxu0 0.0
          %711 = vmatpush1.xpose.msra.mxu0 0.0
          %712 = vmatprep.subr.mxu0 0.0
          %713 = vmatpush1.xpose.msra.mxu0 0.0
          %714 = vmatprep.subr.mxu0 0.0
          %715 = vmatpush1.xpose.msra.mxu0 0.0
          %716 = vmatprep.subr.mxu0 0.0
          %717 = vmatpush1.xpose.msra.mxu0 0.0
          %718 = vmatprep.subr.mxu0 0.0
          %719 = vmatpush1.xpose.msra.mxu0 0.0
          %720 = vmatprep.subr.mxu0 0.0
          %721 = vmatpush1.xpose.msra.mxu0 0.0
          %722 = vmatprep.subr.mxu0 0.0
          %723 = vmatpush1.xpose.msra.mxu0 0.0
          %724 = vmatprep.subr.mxu0 0.0
          %725 = vmatpush1.xpose.msra.mxu0 0.0
          %726 = vmatprep.subr.mxu0 0.0
          %727 = vmatpush1.xpose.msra.mxu0 0.0
          %728 = vmatprep.subr.mxu0 0.0
          %729 = vmatpush1.xpose.msra.mxu0 0.0
          %730 = vmatprep.mubr.f32.mxu0 0.0
          %731 = vmatmul.mubr.f32.gmra.mrb[0].mxu0 %v661
          %v732 = vpop.f32.mrb[0].mxu0
          %v733 = vadd.f32 0.0, %v732
          %v734 = vpop.f32.mrb[0].mxu0
          %735 = vdwg.mxu0
          %v736 = vsel %vm659, %v733, -inf
          %737 = vmax.xlane.f32.xlu0 %v736
          %v738 = vpop.xlane.xlu0 %737
          %v739 = vmax.f32 %v651, %v738
          %v740 = vsub.f32 %v651, %v739
          %v741 = vmul.f32 %v740, 1.442695
          %v742 = vpow.pop %v741
          %v743 = vsub.f32 %v733, %v739
          %v744 = vmul.f32 %v743, 1.442695
          %v745 = vpow.pop %v744
          %v746 = vmul.f32 %v742, %v652
          %v747 = vsel %vm659, %v745, 0.0
          %748 = vadd.xlane.f32.xlu0 %v747
          %v749 = vpop.xlane.xlu0 %748
          %v750 = vadd.f32 %v746, %v749
          %v751 = vmul.f32 %v742, %v653
          %v753 = vsel %vm659, %v745, 0
          %755 = vmatprep.subr.mxu0 0.0
          %756 = vmatpush1.msra.mxu0 %v658
          %757 = vmatprep.subr.mxu0 0.0
          %758 = vmatpush1.msra.mxu0 0.0
          %759 = vmatprep.subr.mxu0 0.0
          %760 = vmatpush1.msra.mxu0 0.0
          %761 = vmatprep.subr.mxu0 0.0
          %762 = vmatpush1.msra.mxu0 0.0
          %763 = vmatprep.subr.mxu0 0.0
          %764 = vmatpush1.msra.mxu0 0.0
          %765 = vmatprep.subr.mxu0 0.0
          %766 = vmatpush1.msra.mxu0 0.0
          %767 = vmatprep.subr.mxu0 0.0
          %768 = vmatpush1.msra.mxu0 0.0
          %769 = vmatprep.subr.mxu0 0.0
          %770 = vmatpush1.msra.mxu0 0.0
          %771 = vmatprep.subr.mxu0 0.0
          %772 = vmatpush1.msra.mxu0 0.0
          %773 = vmatprep.subr.mxu0 0.0
          %774 = vmatpush1.msra.mxu0 0.0
          %775 = vmatprep.subr.mxu0 0.0
          %776 = vmatpush1.msra.mxu0 0.0
          %777 = vmatprep.subr.mxu0 0.0
          %778 = vmatpush1.msra.mxu0 0.0
          %779 = vmatprep.subr.mxu0 0.0
          %780 = vmatpush1.msra.mxu0 0.0
          %781 = vmatprep.subr.mxu0 0.0
          %782 = vmatpush1.msra.mxu0 0.0
          %783 = vmatprep.subr.mxu0 0.0
          %784 = vmatpush1.msra.mxu0 0.0
          %785 = vmatprep.subr.mxu0 0.0
          %786 = vmatpush1.msra.mxu0 0.0
          %787 = vmatprep.subr.mxu0 0.0
          %788 = vmatpush1.msra.mxu0 0.0
          %789 = vmatprep.subr.mxu0 0.0
          %790 = vmatpush1.msra.mxu0 0.0
          %791 = vmatprep.subr.mxu0 0.0
          %792 = vmatpush1.msra.mxu0 0.0
          %793 = vmatprep.subr.mxu0 0.0
          %794 = vmatpush1.msra.mxu0 0.0
          %795 = vmatprep.subr.mxu0 0.0
          %796 = vmatpush1.msra.mxu0 0.0
          %797 = vmatprep.subr.mxu0 0.0
          %798 = vmatpush1.msra.mxu0 0.0
          %799 = vmatprep.subr.mxu0 0.0
          %800 = vmatpush1.msra.mxu0 0.0
          %801 = vmatprep.subr.mxu0 0.0
          %802 = vmatpush1.msra.mxu0 0.0
          %803 = vmatprep.subr.mxu0 0.0
          %804 = vmatpush1.msra.mxu0 0.0
          %805 = vmatprep.subr.mxu0 0.0
          %806 = vmatpush1.msra.mxu0 0.0
          %807 = vmatprep.subr.mxu0 0.0
          %808 = vmatpush1.msra.mxu0 0.0
          %809 = vmatprep.subr.mxu0 0.0
          %810 = vmatpush1.msra.mxu0 0.0
          %811 = vmatprep.subr.mxu0 0.0
          %812 = vmatpush1.msra.mxu0 0.0
          %813 = vmatprep.subr.mxu0 0.0
          %814 = vmatpush1.msra.mxu0 0.0
          %815 = vmatprep.subr.mxu0 0.0
          %816 = vmatpush1.msra.mxu0 0.0
          %817 = vmatprep.subr.mxu0 0.0
          %818 = vmatpush1.msra.mxu0 0.0
          %819 = vmatprep.mubr.f32.mxu0 0.0
          %820 = vmatmul.mubr.f32.gmra.mrb[0].mxu0 %v753
          %v821 = vpop.f32.mrb[0].mxu0
          %v822 = vadd.f32 0.0, %v821
          %v823 = vpop.f32.mrb[0].mxu0
          %824 = vdwg.mxu0
          %v825 = vadd.f32 %v751, %v822
        $region81: #{tpu_custom_call.1} parent=47 // loop_footer
          %s648 = sadd.s32 %s646, 1
        $region82: #{tpu_custom_call.1} parent=47 // loop_footer_branch
          %645 = sbr.rel target = $region78
        $region83: #{tpu_custom_call.1} parent=47 // loop_exit
          _
        %s826 = smul.u32 %s34, 8
        %s827 = scalar_lea.vmem [#allocation2], %s826
        %v828 = vld [vmem:[%s827] sm:$0xff]
        %s829 = scalar_lea.vmem [#allocation3], %s826
        %v830 = vld [vmem:[%s829] sm:$0xff]
        %vm831 = vcmask 64512
        %v833 = vsel %vm831, %v644, 0
        %v836 = vsel %vm831, %v828, 0
        %838 = vmatprep.subr.mxu0 0.0
        %839 = vmatpush1.xpose.msra.mxu0 %v836
        %840 = vmatprep.subr.mxu0 0.0
        %841 = vmatpush1.xpose.msra.mxu0 0.0
        %842 = vmatprep.subr.mxu0 0.0
        %843 = vmatpush1.xpose.msra.mxu0 0.0
        %844 = vmatprep.subr.mxu0 0.0
        %845 = vmatpush1.xpose.msra.mxu0 0.0
        %846 = vmatprep.subr.mxu0 0.0
        %847 = vmatpush1.xpose.msra.mxu0 0.0
        %848 = vmatprep.subr.mxu0 0.0
        %849 = vmatpush1.xpose.msra.mxu0 0.0
        %850 = vmatprep.subr.mxu0 0.0
        %851 = vmatpush1.xpose.msra.mxu0 0.0
        %852 = vmatprep.subr.mxu0 0.0
        %853 = vmatpush1.xpose.msra.mxu0 0.0
        %854 = vmatprep.subr.mxu0 0.0
        %855 = vmatpush1.xpose.msra.mxu0 0.0
        %856 = vmatprep.subr.mxu0 0.0
        %857 = vmatpush1.xpose.msra.mxu0 0.0
        %858 = vmatprep.subr.mxu0 0.0
        %859 = vmatpush1.xpose.msra.mxu0 0.0
        %860 = vmatprep.subr.mxu0 0.0
        %861 = vmatpush1.xpose.msra.mxu0 0.0
        %862 = vmatprep.subr.mxu0 0.0
        %863 = vmatpush1.xpose.msra.mxu0 0.0
        %864 = vmatprep.subr.mxu0 0.0
        %865 = vmatpush1.xpose.msra.mxu0 0.0
        %866 = vmatprep.subr.mxu0 0.0
        %867 = vmatpush1.xpose.msra.mxu0 0.0
        %868 = vmatprep.subr.mxu0 0.0
        %869 = vmatpush1.xpose.msra.mxu0 0.0
        %870 = vmatprep.subr.mxu0 0.0
        %871 = vmatpush1.xpose.msra.mxu0 0.0
        %872 = vmatprep.subr.mxu0 0.0
        %873 = vmatpush1.xpose.msra.mxu0 0.0
        %874 = vmatprep.subr.mxu0 0.0
        %875 = vmatpush1.xpose.msra.mxu0 0.0
        %876 = vmatprep.subr.mxu0 0.0
        %877 = vmatpush1.xpose.msra.mxu0 0.0
        %878 = vmatprep.subr.mxu0 0.0
        %879 = vmatpush1.xpose.msra.mxu0 0.0
        %880 = vmatprep.subr.mxu0 0.0
        %881 = vmatpush1.xpose.msra.mxu0 0.0
        %882 = vmatprep.subr.mxu0 0.0
        %883 = vmatpush1.xpose.msra.mxu0 0.0
        %884 = vmatprep.subr.mxu0 0.0
        %885 = vmatpush1.xpose.msra.mxu0 0.0
        %886 = vmatprep.subr.mxu0 0.0
        %887 = vmatpush1.xpose.msra.mxu0 0.0
        %888 = vmatprep.subr.mxu0 0.0
        %889 = vmatpush1.xpose.msra.mxu0 0.0
        %890 = vmatprep.subr.mxu0 0.0
        %891 = vmatpush1.xpose.msra.mxu0 0.0
        %892 = vmatprep.subr.mxu0 0.0
        %893 = vmatpush1.xpose.msra.mxu0 0.0
        %894 = vmatprep.subr.mxu0 0.0
        %895 = vmatpush1.xpose.msra.mxu0 0.0
        %896 = vmatprep.subr.mxu0 0.0
        %897 = vmatpush1.xpose.msra.mxu0 0.0
        %898 = vmatprep.subr.mxu0 0.0
        %899 = vmatpush1.xpose.msra.mxu0 0.0
        %900 = vmatprep.subr.mxu0 0.0
        %901 = vmatpush1.xpose.msra.mxu0 0.0
        %902 = vmatprep.mubr.f32.mxu0 0.0
        %903 = vmatmul.mubr.f32.gmra.mrb[0].mxu0 %v833
        %v904 = vpop.f32.mrb[0].mxu0
        %v905 = vadd.f32 0.0, %v904
        %v906 = vpop.f32.mrb[0].mxu0
        %907 = vdwg.mxu0
        %v908 = vlaneseq
        %v909 = vshrl.u32 %v908, 7
        %v910 = vlaneseq
        %v911 = vand.u32 %v910, 127
        %vm912 = vcmp.le.s32.totalorder %v911, %v909
        %v913 = vsel %vm912, %v905, -inf
        %v914 = vsel %vm831, %v913, -inf
        %915 = vmax.xlane.f32.xlu0 %v914
        %v916 = vpop.xlane.xlu0 %915
        %v917 = vmax.f32 %v651, %v916
        %v918 = vsub.f32 %v651, %v917
        %v919 = vmul.f32 %v918, 1.442695
        %v920 = vpow.pop %v919
        %v921 = vsub.f32 %v913, %v917
        %v922 = vmul.f32 %v921, 1.442695
        %v923 = vpow.pop %v922
        %v924 = vmul.f32 %v920, %v652
        %v925 = vsel %vm831, %v923, 0.0
        %926 = vadd.xlane.f32.xlu0 %v925
        %v927 = vpop.xlane.xlu0 %926
        %v928 = vadd.f32 %v924, %v927
        %v929 = vmul.f32 %v920, %v653
        %v931 = vsel %vm831, %v923, 0
        %933 = vmatprep.subr.mxu0 0.0
        %934 = vmatpush1.msra.mxu0 %v830
        %935 = vmatprep.subr.mxu0 0.0
        %936 = vmatpush1.msra.mxu0 0.0
        %937 = vmatprep.subr.mxu0 0.0
        %938 = vmatpush1.msra.mxu0 0.0
        %939 = vmatprep.subr.mxu0 0.0
        %940 = vmatpush1.msra.mxu0 0.0
        %941 = vmatprep.subr.mxu0 0.0
        %942 = vmatpush1.msra.mxu0 0.0
        %943 = vmatprep.subr.mxu0 0.0
        %944 = vmatpush1.msra.mxu0 0.0
        %945 = vmatprep.subr.mxu0 0.0
        %946 = vmatpush1.msra.mxu0 0.0
        %947 = vmatprep.subr.mxu0 0.0
        %948 = vmatpush1.msra.mxu0 0.0
        %949 = vmatprep.subr.mxu0 0.0
        %950 = vmatpush1.msra.mxu0 0.0
        %951 = vmatprep.subr.mxu0 0.0
        %952 = vmatpush1.msra.mxu0 0.0
        %953 = vmatprep.subr.mxu0 0.0
        %954 = vmatpush1.msra.mxu0 0.0
        %955 = vmatprep.subr.mxu0 0.0
        %956 = vmatpush1.msra.mxu0 0.0
        %957 = vmatprep.subr.mxu0 0.0
        %958 = vmatpush1.msra.mxu0 0.0
        %959 = vmatprep.subr.mxu0 0.0
        %960 = vmatpush1.msra.mxu0 0.0
        %961 = vmatprep.subr.mxu0 0.0
        %962 = vmatpush1.msra.mxu0 0.0
        %963 = vmatprep.subr.mxu0 0.0
        %964 = vmatpush1.msra.mxu0 0.0
        %965 = vmatprep.subr.mxu0 0.0
        %966 = vmatpush1.msra.mxu0 0.0
        %967 = vmatprep.subr.mxu0 0.0
        %968 = vmatpush1.msra.mxu0 0.0
        %969 = vmatprep.subr.mxu0 0.0
        %970 = vmatpush1.msra.mxu0 0.0
        %971 = vmatprep.subr.mxu0 0.0
        %972 = vmatpush1.msra.mxu0 0.0
        %973 = vmatprep.subr.mxu0 0.0
        %974 = vmatpush1.msra.mxu0 0.0
        %975 = vmatprep.subr.mxu0 0.0
        %976 = vmatpush1.msra.mxu0 0.0
        %977 = vmatprep.subr.mxu0 0.0
        %978 = vmatpush1.msra.mxu0 0.0
        %979 = vmatprep.subr.mxu0 0.0
        %980 = vmatpush1.msra.mxu0 0.0
        %981 = vmatprep.subr.mxu0 0.0
        %982 = vmatpush1.msra.mxu0 0.0
        %983 = vmatprep.subr.mxu0 0.0
        %984 = vmatpush1.msra.mxu0 0.0
        %985 = vmatprep.subr.mxu0 0.0
        %986 = vmatpush1.msra.mxu0 0.0
        %987 = vmatprep.subr.mxu0 0.0
        %988 = vmatpush1.msra.mxu0 0.0
        %989 = vmatprep.subr.mxu0 0.0
        %990 = vmatpush1.msra.mxu0 0.0
        %991 = vmatprep.subr.mxu0 0.0
        %992 = vmatpush1.msra.mxu0 0.0
        %993 = vmatprep.subr.mxu0 0.0
        %994 = vmatpush1.msra.mxu0 0.0
        %995 = vmatprep.subr.mxu0 0.0
        %996 = vmatpush1.msra.mxu0 0.0
        %997 = vmatprep.mubr.f32.mxu0 0.0
        %998 = vmatmul.mubr.f32.gmra.mrb[0].mxu0 %v931
        %v999 = vpop.f32.mrb[0].mxu0
        %v1000 = vadd.f32 0.0, %v999
        %v1001 = vpop.f32.mrb[0].mxu0
        %1002 = vdwg.mxu0
        %v1003 = vadd.f32 %v929, %v1000
        %v1004 = vrcp.pop %v928
        %v1005 = vmul.f32 %v1003, %v1004
        // While loop
        $region84: #{tpu_custom_call.1} parent=47 // loop_pre_header
          _
        $region85: #{tpu_custom_call.1} parent=47 // loop_header
          %s1007 = sphi 0, %s1009
          %p1008 = scmp.ge.s32.totalorder %s1007, %s34
          %v1012 = vphi -inf, %v1102
          %v1013 = vphi 0.0, %v1113
          %v1014 = vphi 0.0, %v1192
        $region86: #{tpu_custom_call.1} parent=47 // loop_header_branch
          %1011 = sbr.rel (%p1008) target = $region90
        $region87: #{tpu_custom_call.1} parent=47 // loop_body
          %s1015 = smul.u32 %s1007, 8
          %s1016 = scalar_lea.vmem [#allocation2], %s1015
          %v1017 = vld [vmem:[%s1016] sm:$0xff]
          %s1018 = scalar_lea.vmem [#allocation3], %s1015
          %v1019 = vld [vmem:[%s1018] sm:$0xff]
          %1020 = vrot.lane.b32.xlu0 %v644, 120
          %v1021 = vpop.permute.xlu0 %1020
          %1023 = vrot.lane.b32.xlu0 %v1017, 120
          %v1024 = vpop.permute.xlu0 %1023
          %v1025 = vsel %vm831, %v1021, 0
          %v1027 = vsel %vm831, %v1024, 0
          %1029 = vmatprep.subr.mxu0 0.0
          %1030 = vmatpush1.xpose.msra.mxu0 %v1027
          %1031 = vmatprep.subr.mxu0 0.0
          %1032 = vmatpush1.xpose.msra.mxu0 0.0
          %1033 = vmatprep.subr.mxu0 0.0
          %1034 = vmatpush1.xpose.msra.mxu0 0.0
          %1035 = vmatprep.subr.mxu0 0.0
          %1036 = vmatpush1.xpose.msra.mxu0 0.0
          %1037 = vmatprep.subr.mxu0 0.0
          %1038 = vmatpush1.xpose.msra.mxu0 0.0
          %1039 = vmatprep.subr.mxu0 0.0
          %1040 = vmatpush1.xpose.msra.mxu0 0.0
          %1041 = vmatprep.subr.mxu0 0.0
          %1042 = vmatpush1.xpose.msra.mxu0 0.0
          %1043 = vmatprep.subr.mxu0 0.0
          %1044 = vmatpush1.xpose.msra.mxu0 0.0
          %1045 = vmatprep.subr.mxu0 0.0
          %1046 = vmatpush1.xpose.msra.mxu0 0.0
          %1047 = vmatprep.subr.mxu0 0.0
          %1048 = vmatpush1.xpose.msra.mxu0 0.0
          %1049 = vmatprep.subr.mxu0 0.0
          %1050 = vmatpush1.xpose.msra.mxu0 0.0
          %1051 = vmatprep.subr.mxu0 0.0
          %1052 = vmatpush1.xpose.msra.mxu0 0.0
          %1053 = vmatprep.subr.mxu0 0.0
          %1054 = vmatpush1.xpose.msra.mxu0 0.0
          %1055 = vmatprep.subr.mxu0 0.0
          %1056 = vmatpush1.xpose.msra.mxu0 0.0
          %1057 = vmatprep.subr.mxu0 0.0
          %1058 = vmatpush1.xpose.msra.mxu0 0.0
          %1059 = vmatprep.subr.mxu0 0.0
          %1060 = vmatpush1.xpose.msra.mxu0 0.0
          %1061 = vmatprep.subr.mxu0 0.0
          %1062 = vmatpush1.xpose.msra.mxu0 0.0
          %1063 = vmatprep.subr.mxu0 0.0
          %1064 = vmatpush1.xpose.msra.mxu0 0.0
          %1065 = vmatprep.subr.mxu0 0.0
          %1066 = vmatpush1.xpose.msra.mxu0 0.0
          %1067 = vmatprep.subr.mxu0 0.0
          %1068 = vmatpush1.xpose.msra.mxu0 0.0
          %1069 = vmatprep.subr.mxu0 0.0
          %1070 = vmatpush1.xpose.msra.mxu0 0.0
          %1071 = vmatprep.subr.mxu0 0.0
          %1072 = vmatpush1.xpose.msra.mxu0 0.0
          %1073 = vmatprep.subr.mxu0 0.0
          %1074 = vmatpush1.xpose.msra.mxu0 0.0
          %1075 = vmatprep.subr.mxu0 0.0
          %1076 = vmatpush1.xpose.msra.mxu0 0.0
          %1077 = vmatprep.subr.mxu0 0.0
          %1078 = vmatpush1.xpose.msra.mxu0 0.0
          %1079 = vmatprep.subr.mxu0 0.0
          %1080 = vmatpush1.xpose.msra.mxu0 0.0
          %1081 = vmatprep.subr.mxu0 0.0
          %1082 = vmatpush1.xpose.msra.mxu0 0.0
          %1083 = vmatprep.subr.mxu0 0.0
          %1084 = vmatpush1.xpose.msra.mxu0 0.0
          %1085 = vmatprep.subr.mxu0 0.0
          %1086 = vmatpush1.xpose.msra.mxu0 0.0
          %1087 = vmatprep.subr.mxu0 0.0
          %1088 = vmatpush1.xpose.msra.mxu0 0.0
          %1089 = vmatprep.subr.mxu0 0.0
          %1090 = vmatpush1.xpose.msra.mxu0 0.0
          %1091 = vmatprep.subr.mxu0 0.0
          %1092 = vmatpush1.xpose.msra.mxu0 0.0
          %1093 = vmatprep.mubr.f32.mxu0 0.0
          %1094 = vmatmul.mubr.f32.gmra.mrb[0].mxu0 %v1025
          %v1095 = vpop.f32.mrb[0].mxu0
          %v1096 = vadd.f32 0.0, %v1095
          %v1097 = vpop.f32.mrb[0].mxu0
          %1098 = vdwg.mxu0
          %v1099 = vsel %vm831, %v1096, -inf
          %1100 = vmax.xlane.f32.xlu0 %v1099
          %v1101 = vpop.xlane.xlu0 %1100
          %v1102 = vmax.f32 %v1012, %v1101
          %v1103 = vsub.f32 %v1012, %v1102
          %v1104 = vmul.f32 %v1103, 1.442695
          %v1105 = vpow.pop %v1104
          %v1106 = vsub.f32 %v1096, %v1102
          %v1107 = vmul.f32 %v1106, 1.442695
          %v1108 = vpow.pop %v1107
          %v1109 = vmul.f32 %v1105, %v1013
          %v1110 = vsel %vm831, %v1108, 0.0
          %1111 = vadd.xlane.f32.xlu0 %v1110
          %v1112 = vpop.xlane.xlu0 %1111
          %v1113 = vadd.f32 %v1109, %v1112
          %v1114 = vmul.f32 %v1105, %v1014
          %1116 = vrot.lane.b32.xlu0 %v1019, 120
          %v1117 = vpop.permute.xlu0 %1116
          %v1120 = vsel %vm831, %v1108, 0
          %1122 = vmatprep.subr.mxu0 0.0
          %1123 = vmatpush1.msra.mxu0 %v1117
          %1124 = vmatprep.subr.mxu0 0.0
          %1125 = vmatpush1.msra.mxu0 0.0
          %1126 = vmatprep.subr.mxu0 0.0
          %1127 = vmatpush1.msra.mxu0 0.0
          %1128 = vmatprep.subr.mxu0 0.0
          %1129 = vmatpush1.msra.mxu0 0.0
          %1130 = vmatprep.subr.mxu0 0.0
          %1131 = vmatpush1.msra.mxu0 0.0
          %1132 = vmatprep.subr.mxu0 0.0
          %1133 = vmatpush1.msra.mxu0 0.0
          %1134 = vmatprep.subr.mxu0 0.0
          %1135 = vmatpush1.msra.mxu0 0.0
          %1136 = vmatprep.subr.mxu0 0.0
          %1137 = vmatpush1.msra.mxu0 0.0
          %1138 = vmatprep.subr.mxu0 0.0
          %1139 = vmatpush1.msra.mxu0 0.0
          %1140 = vmatprep.subr.mxu0 0.0
          %1141 = vmatpush1.msra.mxu0 0.0
          %1142 = vmatprep.subr.mxu0 0.0
          %1143 = vmatpush1.msra.mxu0 0.0
          %1144 = vmatprep.subr.mxu0 0.0
          %1145 = vmatpush1.msra.mxu0 0.0
          %1146 = vmatprep.subr.mxu0 0.0
          %1147 = vmatpush1.msra.mxu0 0.0
          %1148 = vmatprep.subr.mxu0 0.0
          %1149 = vmatpush1.msra.mxu0 0.0
          %1150 = vmatprep.subr.mxu0 0.0
          %1151 = vmatpush1.msra.mxu0 0.0
          %1152 = vmatprep.subr.mxu0 0.0
          %1153 = vmatpush1.msra.mxu0 0.0
          %1154 = vmatprep.subr.mxu0 0.0
          %1155 = vmatpush1.msra.mxu0 0.0
          %1156 = vmatprep.subr.mxu0 0.0
          %1157 = vmatpush1.msra.mxu0 0.0
          %1158 = vmatprep.subr.mxu0 0.0
          %1159 = vmatpush1.msra.mxu0 0.0
          %1160 = vmatprep.subr.mxu0 0.0
          %1161 = vmatpush1.msra.mxu0 0.0
          %1162 = vmatprep.subr.mxu0 0.0
          %1163 = vmatpush1.msra.mxu0 0.0
          %1164 = vmatprep.subr.mxu0 0.0
          %1165 = vmatpush1.msra.mxu0 0.0
          %1166 = vmatprep.subr.mxu0 0.0
          %1167 = vmatpush1.msra.mxu0 0.0
          %1168 = vmatprep.subr.mxu0 0.0
          %1169 = vmatpush1.msra.mxu0 0.0
          %1170 = vmatprep.subr.mxu0 0.0
          %1171 = vmatpush1.msra.mxu0 0.0
          %1172 = vmatprep.subr.mxu0 0.0
          %1173 = vmatpush1.msra.mxu0 0.0
          %1174 = vmatprep.subr.mxu0 0.0
          %1175 = vmatpush1.msra.mxu0 0.0
          %1176 = vmatprep.subr.mxu0 0.0
          %1177 = vmatpush1.msra.mxu0 0.0
          %1178 = vmatprep.subr.mxu0 0.0
          %1179 = vmatpush1.msra.mxu0 0.0
          %1180 = vmatprep.subr.mxu0 0.0
          %1181 = vmatpush1.msra.mxu0 0.0
          %1182 = vmatprep.subr.mxu0 0.0
          %1183 = vmatpush1.msra.mxu0 0.0
          %1184 = vmatprep.subr.mxu0 0.0
          %1185 = vmatpush1.msra.mxu0 0.0
          %1186 = vmatprep.mubr.f32.mxu0 0.0
          %1187 = vmatmul.mubr.f32.gmra.mrb[0].mxu0 %v1120
          %v1188 = vpop.f32.mrb[0].mxu0
          %v1189 = vadd.f32 0.0, %v1188
          %v1190 = vpop.f32.mrb[0].mxu0
          %1191 = vdwg.mxu0
          %v1192 = vadd.f32 %v1114, %v1189
        $region88: #{tpu_custom_call.1} parent=47 // loop_footer
          %s1009 = sadd.s32 %s1007, 1
        $region89: #{tpu_custom_call.1} parent=47 // loop_footer_branch
          %1006 = sbr.rel target = $region85
        $region90: #{tpu_custom_call.1} parent=47 // loop_exit
          _
        %1193 = vrot.lane.b32.xlu0 %v644, 120
        %v1194 = vpop.permute.xlu0 %1193
        %1195 = vrot.lane.b32.xlu0 %v828, 120
        %v1196 = vpop.permute.xlu0 %1195
        %v1197 = vsel %vm831, %v1194, 0
        %v1199 = vsel %vm831, %v1196, 0
        %1201 = vmatprep.subr.mxu0 0.0
        %1202 = vmatpush1.xpose.msra.mxu0 %v1199
        %1203 = vmatprep.subr.mxu0 0.0
        %1204 = vmatpush1.xpose.msra.mxu0 0.0
        %1205 = vmatprep.subr.mxu0 0.0
        %1206 = vmatpush1.xpose.msra.mxu0 0.0
        %1207 = vmatprep.subr.mxu0 0.0
        %1208 = vmatpush1.xpose.msra.mxu0 0.0
        %1209 = vmatprep.subr.mxu0 0.0
        %1210 = vmatpush1.xpose.msra.mxu0 0.0
        %1211 = vmatprep.subr.mxu0 0.0
        %1212 = vmatpush1.xpose.msra.mxu0 0.0
        %1213 = vmatprep.subr.mxu0 0.0
        %1214 = vmatpush1.xpose.msra.mxu0 0.0
        %1215 = vmatprep.subr.mxu0 0.0
        %1216 = vmatpush1.xpose.msra.mxu0 0.0
        %1217 = vmatprep.subr.mxu0 0.0
        %1218 = vmatpush1.xpose.msra.mxu0 0.0
        %1219 = vmatprep.subr.mxu0 0.0
        %1220 = vmatpush1.xpose.msra.mxu0 0.0
        %1221 = vmatprep.subr.mxu0 0.0
        %1222 = vmatpush1.xpose.msra.mxu0 0.0
        %1223 = vmatprep.subr.mxu0 0.0
        %1224 = vmatpush1.xpose.msra.mxu0 0.0
        %1225 = vmatprep.subr.mxu0 0.0
        %1226 = vmatpush1.xpose.msra.mxu0 0.0
        %1227 = vmatprep.subr.mxu0 0.0
        %1228 = vmatpush1.xpose.msra.mxu0 0.0
        %1229 = vmatprep.subr.mxu0 0.0
        %1230 = vmatpush1.xpose.msra.mxu0 0.0
        %1231 = vmatprep.subr.mxu0 0.0
        %1232 = vmatpush1.xpose.msra.mxu0 0.0
        %1233 = vmatprep.subr.mxu0 0.0
        %1234 = vmatpush1.xpose.msra.mxu0 0.0
        %1235 = vmatprep.subr.mxu0 0.0
        %1236 = vmatpush1.xpose.msra.mxu0 0.0
        %1237 = vmatprep.subr.mxu0 0.0
        %1238 = vmatpush1.xpose.msra.mxu0 0.0
        %1239 = vmatprep.subr.mxu0 0.0
        %1240 = vmatpush1.xpose.msra.mxu0 0.0
        %1241 = vmatprep.subr.mxu0 0.0
        %1242 = vmatpush1.xpose.msra.mxu0 0.0
        %1243 = vmatprep.subr.mxu0 0.0
        %1244 = vmatpush1.xpose.msra.mxu0 0.0
        %1245 = vmatprep.subr.mxu0 0.0
        %1246 = vmatpush1.xpose.msra.mxu0 0.0
        %1247 = vmatprep.subr.mxu0 0.0
        %1248 = vmatpush1.xpose.msra.mxu0 0.0
        %1249 = vmatprep.subr.mxu0 0.0
        %1250 = vmatpush1.xpose.msra.mxu0 0.0
        %1251 = vmatprep.subr.mxu0 0.0
        %1252 = vmatpush1.xpose.msra.mxu0 0.0
        %1253 = vmatprep.subr.mxu0 0.0
        %1254 = vmatpush1.xpose.msra.mxu0 0.0
        %1255 = vmatprep.subr.mxu0 0.0
        %1256 = vmatpush1.xpose.msra.mxu0 0.0
        %1257 = vmatprep.subr.mxu0 0.0
        %1258 = vmatpush1.xpose.msra.mxu0 0.0
        %1259 = vmatprep.subr.mxu0 0.0
        %1260 = vmatpush1.xpose.msra.mxu0 0.0
        %1261 = vmatprep.subr.mxu0 0.0
        %1262 = vmatpush1.xpose.msra.mxu0 0.0
        %1263 = vmatprep.subr.mxu0 0.0
        %1264 = vmatpush1.xpose.msra.mxu0 0.0
        %1265 = vmatprep.mubr.f32.mxu0 0.0
        %1266 = vmatmul.mubr.f32.gmra.mrb[0].mxu0 %v1197
        %v1267 = vpop.f32.mrb[0].mxu0
        %v1268 = vadd.f32 0.0, %v1267
        %v1269 = vpop.f32.mrb[0].mxu0
        %1270 = vdwg.mxu0
        %v1271 = vsel %vm912, %v1268, -inf
        %v1272 = vsel %vm831, %v1271, -inf
        %1273 = vmax.xlane.f32.xlu0 %v1272
        %v1274 = vpop.xlane.xlu0 %1273
        %v1275 = vmax.f32 %v1012, %v1274
        %v1276 = vsub.f32 %v1012, %v1275
        %v1277 = vmul.f32 %v1276, 1.442695
        %v1278 = vpow.pop %v1277
        %v1279 = vsub.f32 %v1271, %v1275
        %v1280 = vmul.f32 %v1279, 1.442695
        %v1281 = vpow.pop %v1280
        %v1282 = vmul.f32 %v1278, %v1013
        %v1283 = vsel %vm831, %v1281, 0.0
        %1284 = vadd.xlane.f32.xlu0 %v1283
        %v1285 = vpop.xlane.xlu0 %1284
        %v1286 = vadd.f32 %v1282, %v1285
        %v1287 = vmul.f32 %v1278, %v1014
        %1289 = vrot.lane.b32.xlu0 %v830, 120
        %v1290 = vpop.permute.xlu0 %1289
        %v1293 = vsel %vm831, %v1281, 0
        %1295 = vmatprep.subr.mxu0 0.0
        %1296 = vmatpush1.msra.mxu0 %v1290
        %1297 = vmatprep.subr.mxu0 0.0
        %1298 = vmatpush1.msra.mxu0 0.0
        %1299 = vmatprep.subr.mxu0 0.0
        %1300 = vmatpush1.msra.mxu0 0.0
        %1301 = vmatprep.subr.mxu0 0.0
        %1302 = vmatpush1.msra.mxu0 0.0
        %1303 = vmatprep.subr.mxu0 0.0
        %1304 = vmatpush1.msra.mxu0 0.0
        %1305 = vmatprep.subr.mxu0 0.0
        %1306 = vmatpush1.msra.mxu0 0.0
        %1307 = vmatprep.subr.mxu0 0.0
        %1308 = vmatpush1.msra.mxu0 0.0
        %1309 = vmatprep.subr.mxu0 0.0
        %1310 = vmatpush1.msra.mxu0 0.0
        %1311 = vmatprep.subr.mxu0 0.0
        %1312 = vmatpush1.msra.mxu0 0.0
        %1313 = vmatprep.subr.mxu0 0.0
        %1314 = vmatpush1.msra.mxu0 0.0
        %1315 = vmatprep.subr.mxu0 0.0
        %1316 = vmatpush1.msra.mxu0 0.0
        %1317 = vmatprep.subr.mxu0 0.0
        %1318 = vmatpush1.msra.mxu0 0.0
        %1319 = vmatprep.subr.mxu0 0.0
        %1320 = vmatpush1.msra.mxu0 0.0
        %1321 = vmatprep.subr.mxu0 0.0
        %1322 = vmatpush1.msra.mxu0 0.0
        %1323 = vmatprep.subr.mxu0 0.0
        %1324 = vmatpush1.msra.mxu0 0.0
        %1325 = vmatprep.subr.mxu0 0.0
        %1326 = vmatpush1.msra.mxu0 0.0
        %1327 = vmatprep.subr.mxu0 0.0
        %1328 = vmatpush1.msra.mxu0 0.0
        %1329 = vmatprep.subr.mxu0 0.0
        %1330 = vmatpush1.msra.mxu0 0.0
        %1331 = vmatprep.subr.mxu0 0.0
        %1332 = vmatpush1.msra.mxu0 0.0
        %1333 = vmatprep.subr.mxu0 0.0
        %1334 = vmatpush1.msra.mxu0 0.0
        %1335 = vmatprep.subr.mxu0 0.0
        %1336 = vmatpush1.msra.mxu0 0.0
        %1337 = vmatprep.subr.mxu0 0.0
        %1338 = vmatpush1.msra.mxu0 0.0
        %1339 = vmatprep.subr.mxu0 0.0
        %1340 = vmatpush1.msra.mxu0 0.0
        %1341 = vmatprep.subr.mxu0 0.0
        %1342 = vmatpush1.msra.mxu0 0.0
        %1343 = vmatprep.subr.mxu0 0.0
        %1344 = vmatpush1.msra.mxu0 0.0
        %1345 = vmatprep.subr.mxu0 0.0
        %1346 = vmatpush1.msra.mxu0 0.0
        %1347 = vmatprep.subr.mxu0 0.0
        %1348 = vmatpush1.msra.mxu0 0.0
        %1349 = vmatprep.subr.mxu0 0.0
        %1350 = vmatpush1.msra.mxu0 0.0
        %1351 = vmatprep.subr.mxu0 0.0
        %1352 = vmatpush1.msra.mxu0 0.0
        %1353 = vmatprep.subr.mxu0 0.0
        %1354 = vmatpush1.msra.mxu0 0.0
        %1355 = vmatprep.subr.mxu0 0.0
        %1356 = vmatpush1.msra.mxu0 0.0
        %1357 = vmatprep.subr.mxu0 0.0
        %1358 = vmatpush1.msra.mxu0 0.0
        %1359 = vmatprep.mubr.f32.mxu0 0.0
        %1360 = vmatmul.mubr.f32.gmra.mrb[0].mxu0 %v1293
        %v1361 = vpop.f32.mrb[0].mxu0
        %v1362 = vadd.f32 0.0, %v1361
        %v1363 = vpop.f32.mrb[0].mxu0
        %1364 = vdwg.mxu0
        %v1365 = vadd.f32 %v1287, %v1362
        %v1366 = vrcp.pop %v1286
        %v1367 = vmul.f32 %v1365, %v1366
        // While loop
        $region91: #{tpu_custom_call.1} parent=47 // loop_pre_header
          _
        $region92: #{tpu_custom_call.1} parent=47 // loop_header
          %s1369 = sphi 0, %s1371
          %p1370 = scmp.ge.s32.totalorder %s1369, %s34
          %v1374 = vphi -inf, %v1464
          %v1375 = vphi 0.0, %v1475
          %v1376 = vphi 0.0, %v1554
        $region93: #{tpu_custom_call.1} parent=47 // loop_header_branch
          %1373 = sbr.rel (%p1370) target = $region97
        $region94: #{tpu_custom_call.1} parent=47 // loop_body
          %s1377 = smul.u32 %s1369, 8
          %s1378 = scalar_lea.vmem [#allocation2], %s1377
          %v1379 = vld [vmem:[%s1378] sm:$0xff]
          %s1380 = scalar_lea.vmem [#allocation3], %s1377
          %v1381 = vld [vmem:[%s1380] sm:$0xff]
          %1382 = vrot.lane.b32.xlu0 %v644, 112
          %v1383 = vpop.permute.xlu0 %1382
          %1385 = vrot.lane.b32.xlu0 %v1379, 112
          %v1386 = vpop.permute.xlu0 %1385
          %v1387 = vsel %vm831, %v1383, 0
          %v1389 = vsel %vm831, %v1386, 0
          %1391 = vmatprep.subr.mxu0 0.0
          %1392 = vmatpush1.xpose.msra.mxu0 %v1389
          %1393 = vmatprep.subr.mxu0 0.0
          %1394 = vmatpush1.xpose.msra.mxu0 0.0
          %1395 = vmatprep.subr.mxu0 0.0
          %1396 = vmatpush1.xpose.msra.mxu0 0.0
          %1397 = vmatprep.subr.mxu0 0.0
          %1398 = vmatpush1.xpose.msra.mxu0 0.0
          %1399 = vmatprep.subr.mxu0 0.0
          %1400 = vmatpush1.xpose.msra.mxu0 0.0
          %1401 = vmatprep.subr.mxu0 0.0
          %1402 = vmatpush1.xpose.msra.mxu0 0.0
          %1403 = vmatprep.subr.mxu0 0.0
          %1404 = vmatpush1.xpose.msra.mxu0 0.0
          %1405 = vmatprep.subr.mxu0 0.0
          %1406 = vmatpush1.xpose.msra.mxu0 0.0
          %1407 = vmatprep.subr.mxu0 0.0
          %1408 = vmatpush1.xpose.msra.mxu0 0.0
          %1409 = vmatprep.subr.mxu0 0.0
          %1410 = vmatpush1.xpose.msra.mxu0 0.0
          %1411 = vmatprep.subr.mxu0 0.0
          %1412 = vmatpush1.xpose.msra.mxu0 0.0
          %1413 = vmatprep.subr.mxu0 0.0
          %1414 = vmatpush1.xpose.msra.mxu0 0.0
          %1415 = vmatprep.subr.mxu0 0.0
          %1416 = vmatpush1.xpose.msra.mxu0 0.0
          %1417 = vmatprep.subr.mxu0 0.0
          %1418 = vmatpush1.xpose.msra.mxu0 0.0
          %1419 = vmatprep.subr.mxu0 0.0
          %1420 = vmatpush1.xpose.msra.mxu0 0.0
          %1421 = vmatprep.subr.mxu0 0.0
          %1422 = vmatpush1.xpose.msra.mxu0 0.0
          %1423 = vmatprep.subr.mxu0 0.0
          %1424 = vmatpush1.xpose.msra.mxu0 0.0
          %1425 = vmatprep.subr.mxu0 0.0
          %1426 = vmatpush1.xpose.msra.mxu0 0.0
          %1427 = vmatprep.subr.mxu0 0.0
          %1428 = vmatpush1.xpose.msra.mxu0 0.0
          %1429 = vmatprep.subr.mxu0 0.0
          %1430 = vmatpush1.xpose.msra.mxu0 0.0
          %1431 = vmatprep.subr.mxu0 0.0
          %1432 = vmatpush1.xpose.msra.mxu0 0.0
          %1433 = vmatprep.subr.mxu0 0.0
          %1434 = vmatpush1.xpose.msra.mxu0 0.0
          %1435 = vmatprep.subr.mxu0 0.0
          %1436 = vmatpush1.xpose.msra.mxu0 0.0
          %1437 = vmatprep.subr.mxu0 0.0
          %1438 = vmatpush1.xpose.msra.mxu0 0.0
          %1439 = vmatprep.subr.mxu0 0.0
          %1440 = vmatpush1.xpose.msra.mxu0 0.0
          %1441 = vmatprep.subr.mxu0 0.0
          %1442 = vmatpush1.xpose.msra.mxu0 0.0
          %1443 = vmatprep.subr.mxu0 0.0
          %1444 = vmatpush1.xpose.msra.mxu0 0.0
          %1445 = vmatprep.subr.mxu0 0.0
          %1446 = vmatpush1.xpose.msra.mxu0 0.0
          %1447 = vmatprep.subr.mxu0 0.0
          %1448 = vmatpush1.xpose.msra.mxu0 0.0
          %1449 = vmatprep.subr.mxu0 0.0
          %1450 = vmatpush1.xpose.msra.mxu0 0.0
          %1451 = vmatprep.subr.mxu0 0.0
          %1452 = vmatpush1.xpose.msra.mxu0 0.0
          %1453 = vmatprep.subr.mxu0 0.0
          %1454 = vmatpush1.xpose.msra.mxu0 0.0
          %1455 = vmatprep.mubr.f32.mxu0 0.0
          %1456 = vmatmul.mubr.f32.gmra.mrb[0].mxu0 %v1387
          %v1457 = vpop.f32.mrb[0].mxu0
          %v1458 = vadd.f32 0.0, %v1457
          %v1459 = vpop.f32.mrb[0].mxu0
          %1460 = vdwg.mxu0
          %v1461 = vsel %vm831, %v1458, -inf
          %1462 = vmax.xlane.f32.xlu0 %v1461
          %v1463 = vpop.xlane.xlu0 %1462
          %v1464 = vmax.f32 %v1374, %v1463
          %v1465 = vsub.f32 %v1374, %v1464
          %v1466 = vmul.f32 %v1465, 1.442695
          %v1467 = vpow.pop %v1466
          %v1468 = vsub.f32 %v1458, %v1464
          %v1469 = vmul.f32 %v1468, 1.442695
          %v1470 = vpow.pop %v1469
          %v1471 = vmul.f32 %v1467, %v1375
          %v1472 = vsel %vm831, %v1470, 0.0
          %1473 = vadd.xlane.f32.xlu0 %v1472
          %v1474 = vpop.xlane.xlu0 %1473
          %v1475 = vadd.f32 %v1471, %v1474
          %v1476 = vmul.f32 %v1467, %v1376
          %1478 = vrot.lane.b32.xlu0 %v1381, 112
          %v1479 = vpop.permute.xlu0 %1478
          %v1482 = vsel %vm831, %v1470, 0
          %1484 = vmatprep.subr.mxu0 0.0
          %1485 = vmatpush1.msra.mxu0 %v1479
          %1486 = vmatprep.subr.mxu0 0.0
          %1487 = vmatpush1.msra.mxu0 0.0
          %1488 = vmatprep.subr.mxu0 0.0
          %1489 = vmatpush1.msra.mxu0 0.0
          %1490 = vmatprep.subr.mxu0 0.0
          %1491 = vmatpush1.msra.mxu0 0.0
          %1492 = vmatprep.subr.mxu0 0.0
          %1493 = vmatpush1.msra.mxu0 0.0
          %1494 = vmatprep.subr.mxu0 0.0
          %1495 = vmatpush1.msra.mxu0 0.0
          %1496 = vmatprep.subr.mxu0 0.0
          %1497 = vmatpush1.msra.mxu0 0.0
          %1498 = vmatprep.subr.mxu0 0.0
          %1499 = vmatpush1.msra.mxu0 0.0
          %1500 = vmatprep.subr.mxu0 0.0
          %1501 = vmatpush1.msra.mxu0 0.0
          %1502 = vmatprep.subr.mxu0 0.0
          %1503 = vmatpush1.msra.mxu0 0.0
          %1504 = vmatprep.subr.mxu0 0.0
          %1505 = vmatpush1.msra.mxu0 0.0
          %1506 = vmatprep.subr.mxu0 0.0
          %1507 = vmatpush1.msra.mxu0 0.0
          %1508 = vmatprep.subr.mxu0 0.0
          %1509 = vmatpush1.msra.mxu0 0.0
          %1510 = vmatprep.subr.mxu0 0.0
          %1511 = vmatpush1.msra.mxu0 0.0
          %1512 = vmatprep.subr.mxu0 0.0
          %1513 = vmatpush1.msra.mxu0 0.0
          %1514 = vmatprep.subr.mxu0 0.0
          %1515 = vmatpush1.msra.mxu0 0.0
          %1516 = vmatprep.subr.mxu0 0.0
          %1517 = vmatpush1.msra.mxu0 0.0
          %1518 = vmatprep.subr.mxu0 0.0
          %1519 = vmatpush1.msra.mxu0 0.0
          %1520 = vmatprep.subr.mxu0 0.0
          %1521 = vmatpush1.msra.mxu0 0.0
          %1522 = vmatprep.subr.mxu0 0.0
          %1523 = vmatpush1.msra.mxu0 0.0
          %1524 = vmatprep.subr.mxu0 0.0
          %1525 = vmatpush1.msra.mxu0 0.0
          %1526 = vmatprep.subr.mxu0 0.0
          %1527 = vmatpush1.msra.mxu0 0.0
          %1528 = vmatprep.subr.mxu0 0.0
          %1529 = vmatpush1.msra.mxu0 0.0
          %1530 = vmatprep.subr.mxu0 0.0
          %1531 = vmatpush1.msra.mxu0 0.0
          %1532 = vmatprep.subr.mxu0 0.0
          %1533 = vmatpush1.msra.mxu0 0.0
          %1534 = vmatprep.subr.mxu0 0.0
          %1535 = vmatpush1.msra.mxu0 0.0
          %1536 = vmatprep.subr.mxu0 0.0
          %1537 = vmatpush1.msra.mxu0 0.0
          %1538 = vmatprep.subr.mxu0 0.0
          %1539 = vmatpush1.msra.mxu0 0.0
          %1540 = vmatprep.subr.mxu0 0.0
          %1541 = vmatpush1.msra.mxu0 0.0
          %1542 = vmatprep.subr.mxu0 0.0
          %1543 = vmatpush1.msra.mxu0 0.0
          %1544 = vmatprep.subr.mxu0 0.0
          %1545 = vmatpush1.msra.mxu0 0.0
          %1546 = vmatprep.subr.mxu0 0.0
          %1547 = vmatpush1.msra.mxu0 0.0
          %1548 = vmatprep.mubr.f32.mxu0 0.0
          %1549 = vmatmul.mubr.f32.gmra.mrb[0].mxu0 %v1482
          %v1550 = vpop.f32.mrb[0].mxu0
          %v1551 = vadd.f32 0.0, %v1550
          %v1552 = vpop.f32.mrb[0].mxu0
          %1553 = vdwg.mxu0
          %v1554 = vadd.f32 %v1476, %v1551
        $region95: #{tpu_custom_call.1} parent=47 // loop_footer
          %s1371 = sadd.s32 %s1369, 1
        $region96: #{tpu_custom_call.1} parent=47 // loop_footer_branch
          %1368 = sbr.rel target = $region92
        $region97: #{tpu_custom_call.1} parent=47 // loop_exit
          _
        %1555 = vrot.lane.b32.xlu0 %v644, 112
        %v1556 = vpop.permute.xlu0 %1555
        %1557 = vrot.lane.b32.xlu0 %v828, 112
        %v1558 = vpop.permute.xlu0 %1557
        %v1559 = vsel %vm831, %v1556, 0
        %v1561 = vsel %vm831, %v1558, 0
        %1563 = vmatprep.subr.mxu0 0.0
        %1564 = vmatpush1.xpose.msra.mxu0 %v1561
        %1565 = vmatprep.subr.mxu0 0.0
        %1566 = vmatpush1.xpose.msra.mxu0 0.0
        %1567 = vmatprep.subr.mxu0 0.0
        %1568 = vmatpush1.xpose.msra.mxu0 0.0
        %1569 = vmatprep.subr.mxu0 0.0
        %1570 = vmatpush1.xpose.msra.mxu0 0.0
        %1571 = vmatprep.subr.mxu0 0.0
        %1572 = vmatpush1.xpose.msra.mxu0 0.0
        %1573 = vmatprep.subr.mxu0 0.0
        %1574 = vmatpush1.xpose.msra.mxu0 0.0
        %1575 = vmatprep.subr.mxu0 0.0
        %1576 = vmatpush1.xpose.msra.mxu0 0.0
        %1577 = vmatprep.subr.mxu0 0.0
        %1578 = vmatpush1.xpose.msra.mxu0 0.0
        %1579 = vmatprep.subr.mxu0 0.0
        %1580 = vmatpush1.xpose.msra.mxu0 0.0
        %1581 = vmatprep.subr.mxu0 0.0
        %1582 = vmatpush1.xpose.msra.mxu0 0.0
        %1583 = vmatprep.subr.mxu0 0.0
        %1584 = vmatpush1.xpose.msra.mxu0 0.0
        %1585 = vmatprep.subr.mxu0 0.0
        %1586 = vmatpush1.xpose.msra.mxu0 0.0
        %1587 = vmatprep.subr.mxu0 0.0
        %1588 = vmatpush1.xpose.msra.mxu0 0.0
        %1589 = vmatprep.subr.mxu0 0.0
        %1590 = vmatpush1.xpose.msra.mxu0 0.0
        %1591 = vmatprep.subr.mxu0 0.0
        %1592 = vmatpush1.xpose.msra.mxu0 0.0
        %1593 = vmatprep.subr.mxu0 0.0
        %1594 = vmatpush1.xpose.msra.mxu0 0.0
        %1595 = vmatprep.subr.mxu0 0.0
        %1596 = vmatpush1.xpose.msra.mxu0 0.0
        %1597 = vmatprep.subr.mxu0 0.0
        %1598 = vmatpush1.xpose.msra.mxu0 0.0
        %1599 = vmatprep.subr.mxu0 0.0
        %1600 = vmatpush1.xpose.msra.mxu0 0.0
        %1601 = vmatprep.subr.mxu0 0.0
        %1602 = vmatpush1.xpose.msra.mxu0 0.0
        %1603 = vmatprep.subr.mxu0 0.0
        %1604 = vmatpush1.xpose.msra.mxu0 0.0
        %1605 = vmatprep.subr.mxu0 0.0
        %1606 = vmatpush1.xpose.msra.mxu0 0.0
        %1607 = vmatprep.subr.mxu0 0.0
        %1608 = vmatpush1.xpose.msra.mxu0 0.0
        %1609 = vmatprep.subr.mxu0 0.0
        %1610 = vmatpush1.xpose.msra.mxu0 0.0
        %1611 = vmatprep.subr.mxu0 0.0
        %1612 = vmatpush1.xpose.msra.mxu0 0.0
        %1613 = vmatprep.subr.mxu0 0.0
        %1614 = vmatpush1.xpose.msra.mxu0 0.0
        %1615 = vmatprep.subr.mxu0 0.0
        %1616 = vmatpush1.xpose.msra.mxu0 0.0
        %1617 = vmatprep.subr.mxu0 0.0
        %1618 = vmatpush1.xpose.msra.mxu0 0.0
        %1619 = vmatprep.subr.mxu0 0.0
        %1620 = vmatpush1.xpose.msra.mxu0 0.0
        %1621 = vmatprep.subr.mxu0 0.0
        %1622 = vmatpush1.xpose.msra.mxu0 0.0
        %1623 = vmatprep.subr.mxu0 0.0
        %1624 = vmatpush1.xpose.msra.mxu0 0.0
        %1625 = vmatprep.subr.mxu0 0.0
        %1626 = vmatpush1.xpose.msra.mxu0 0.0
        %1627 = vmatprep.mubr.f32.mxu0 0.0
        %1628 = vmatmul.mubr.f32.gmra.mrb[0].mxu0 %v1559
        %v1629 = vpop.f32.mrb[0].mxu0
        %v1630 = vadd.f32 0.0, %v1629
        %v1631 = vpop.f32.mrb[0].mxu0
        %1632 = vdwg.mxu0
        %v1633 = vsel %vm912, %v1630, -inf
        %v1634 = vsel %vm831, %v1633, -inf
        %1635 = vmax.xlane.f32.xlu0 %v1634
        %v1636 = vpop.xlane.xlu0 %1635
        %v1637 = vmax.f32 %v1374, %v1636
        %v1638 = vsub.f32 %v1374, %v1637
        %v1639 = vmul.f32 %v1638, 1.442695
        %v1640 = vpow.pop %v1639
        %v1641 = vsub.f32 %v1633, %v1637
        %v1642 = vmul.f32 %v1641, 1.442695
        %v1643 = vpow.pop %v1642
        %v1644 = vmul.f32 %v1640, %v1375
        %v1645 = vsel %vm831, %v1643, 0.0
        %1646 = vadd.xlane.f32.xlu0 %v1645
        %v1647 = vpop.xlane.xlu0 %1646
        %v1648 = vadd.f32 %v1644, %v1647
        %v1649 = vmul.f32 %v1640, %v1376
        %1650 = vrot.lane.b32.xlu0 %v830, 112
        %v1651 = vpop.permute.xlu0 %1650
        %v1654 = vsel %vm831, %v1643, 0
        %1656 = vmatprep.subr.mxu0 0.0
        %1657 = vmatpush1.msra.mxu0 %v1651
        %1658 = vmatprep.subr.mxu0 0.0
        %1659 = vmatpush1.msra.mxu0 0.0
        %1660 = vmatprep.subr.mxu0 0.0
        %1661 = vmatpush1.msra.mxu0 0.0
        %1662 = vmatprep.subr.mxu0 0.0
        %1663 = vmatpush1.msra.mxu0 0.0
        %1664 = vmatprep.subr.mxu0 0.0
        %1665 = vmatpush1.msra.mxu0 0.0
        %1666 = vmatprep.subr.mxu0 0.0
        %1667 = vmatpush1.msra.mxu0 0.0
        %1668 = vmatprep.subr.mxu0 0.0
        %1669 = vmatpush1.msra.mxu0 0.0
        %1670 = vmatprep.subr.mxu0 0.0
        %1671 = vmatpush1.msra.mxu0 0.0
        %1672 = vmatprep.subr.mxu0 0.0
        %1673 = vmatpush1.msra.mxu0 0.0
        %1674 = vmatprep.subr.mxu0 0.0
        %1675 = vmatpush1.msra.mxu0 0.0
        %1676 = vmatprep.subr.mxu0 0.0
        %1677 = vmatpush1.msra.mxu0 0.0
        %1678 = vmatprep.subr.mxu0 0.0
        %1679 = vmatpush1.msra.mxu0 0.0
        %1680 = vmatprep.subr.mxu0 0.0
        %1681 = vmatpush1.msra.mxu0 0.0
        %1682 = vmatprep.subr.mxu0 0.0
        %1683 = vmatpush1.msra.mxu0 0.0
        %1684 = vmatprep.subr.mxu0 0.0
        %1685 = vmatpush1.msra.mxu0 0.0
        %1686 = vmatprep.subr.mxu0 0.0
        %1687 = vmatpush1.msra.mxu0 0.0
        %1688 = vmatprep.subr.mxu0 0.0
        %1689 = vmatpush1.msra.mxu0 0.0
        %1690 = vmatprep.subr.mxu0 0.0
        %1691 = vmatpush1.msra.mxu0 0.0
        %1692 = vmatprep.subr.mxu0 0.0
        %1693 = vmatpush1.msra.mxu0 0.0
        %1694 = vmatprep.subr.mxu0 0.0
        %1695 = vmatpush1.msra.mxu0 0.0
        %1696 = vmatprep.subr.mxu0 0.0
        %1697 = vmatpush1.msra.mxu0 0.0
        %1698 = vmatprep.subr.mxu0 0.0
        %1699 = vmatpush1.msra.mxu0 0.0
        %1700 = vmatprep.subr.mxu0 0.0
        %1701 = vmatpush1.msra.mxu0 0.0
        %1702 = vmatprep.subr.mxu0 0.0
        %1703 = vmatpush1.msra.mxu0 0.0
        %1704 = vmatprep.subr.mxu0 0.0
        %1705 = vmatpush1.msra.mxu0 0.0
        %1706 = vmatprep.subr.mxu0 0.0
        %1707 = vmatpush1.msra.mxu0 0.0
        %1708 = vmatprep.subr.mxu0 0.0
        %1709 = vmatpush1.msra.mxu0 0.0
        %1710 = vmatprep.subr.mxu0 0.0
        %1711 = vmatpush1.msra.mxu0 0.0
        %1712 = vmatprep.subr.mxu0 0.0
        %1713 = vmatpush1.msra.mxu0 0.0
        %1714 = vmatprep.subr.mxu0 0.0
        %1715 = vmatpush1.msra.mxu0 0.0
        %1716 = vmatprep.subr.mxu0 0.0
        %1717 = vmatpush1.msra.mxu0 0.0
        %1718 = vmatprep.subr.mxu0 0.0
        %1719 = vmatpush1.msra.mxu0 0.0
        %1720 = vmatprep.mubr.f32.mxu0 0.0
        %1721 = vmatmul.mubr.f32.gmra.mrb[0].mxu0 %v1654
        %v1722 = vpop.f32.mrb[0].mxu0
        %v1723 = vadd.f32 0.0, %v1722
        %v1724 = vpop.f32.mrb[0].mxu0
        %1725 = vdwg.mxu0
        %v1726 = vadd.f32 %v1649, %v1723
        %v1727 = vrcp.pop %v1648
        %v1728 = vmul.f32 %v1726, %v1727
        // While loop
        $region98: #{tpu_custom_call.1} parent=47 // loop_pre_header
          _
        $region99: #{tpu_custom_call.1} parent=47 // loop_header
          %s1730 = sphi 0, %s1732
          %p1731 = scmp.ge.s32.totalorder %s1730, %s34
          %v1735 = vphi -inf, %v1825
          %v1736 = vphi 0.0, %v1836
          %v1737 = vphi 0.0, %v1915
        $region100: #{tpu_custom_call.1} parent=47 // loop_header_branch
          %1734 = sbr.rel (%p1731) target = $region104
        $region101: #{tpu_custom_call.1} parent=47 // loop_body
          %s1738 = smul.u32 %s1730, 8
          %s1739 = scalar_lea.vmem [#allocation2], %s1738
          %v1740 = vld [vmem:[%s1739] sm:$0xff]
          %s1741 = scalar_lea.vmem [#allocation3], %s1738
          %v1742 = vld [vmem:[%s1741] sm:$0xff]
          %1743 = vrot.lane.b32.xlu0 %v644, 104
          %v1744 = vpop.permute.xlu0 %1743
          %1746 = vrot.lane.b32.xlu0 %v1740, 104
          %v1747 = vpop.permute.xlu0 %1746
          %v1748 = vsel %vm831, %v1744, 0
          %v1750 = vsel %vm831, %v1747, 0
          %1752 = vmatprep.subr.mxu0 0.0
          %1753 = vmatpush1.xpose.msra.mxu0 %v1750
          %1754 = vmatprep.subr.mxu0 0.0
          %1755 = vmatpush1.xpose.msra.mxu0 0.0
          %1756 = vmatprep.subr.mxu0 0.0
          %1757 = vmatpush1.xpose.msra.mxu0 0.0
          %1758 = vmatprep.subr.mxu0 0.0
          %1759 = vmatpush1.xpose.msra.mxu0 0.0
          %1760 = vmatprep.subr.mxu0 0.0
          %1761 = vmatpush1.xpose.msra.mxu0 0.0
          %1762 = vmatprep.subr.mxu0 0.0
          %1763 = vmatpush1.xpose.msra.mxu0 0.0
          %1764 = vmatprep.subr.mxu0 0.0
          %1765 = vmatpush1.xpose.msra.mxu0 0.0
          %1766 = vmatprep.subr.mxu0 0.0
          %1767 = vmatpush1.xpose.msra.mxu0 0.0
          %1768 = vmatprep.subr.mxu0 0.0
          %1769 = vmatpush1.xpose.msra.mxu0 0.0
          %1770 = vmatprep.subr.mxu0 0.0
          %1771 = vmatpush1.xpose.msra.mxu0 0.0
          %1772 = vmatprep.subr.mxu0 0.0
          %1773 = vmatpush1.xpose.msra.mxu0 0.0
          %1774 = vmatprep.subr.mxu0 0.0
          %1775 = vmatpush1.xpose.msra.mxu0 0.0
          %1776 = vmatprep.subr.mxu0 0.0
          %1777 = vmatpush1.xpose.msra.mxu0 0.0
          %1778 = vmatprep.subr.mxu0 0.0
          %1779 = vmatpush1.xpose.msra.mxu0 0.0
          %1780 = vmatprep.subr.mxu0 0.0
          %1781 = vmatpush1.xpose.msra.mxu0 0.0
          %1782 = vmatprep.subr.mxu0 0.0
          %1783 = vmatpush1.xpose.msra.mxu0 0.0
          %1784 = vmatprep.subr.mxu0 0.0
          %1785 = vmatpush1.xpose.msra.mxu0 0.0
          %1786 = vmatprep.subr.mxu0 0.0
          %1787 = vmatpush1.xpose.msra.mxu0 0.0
          %1788 = vmatprep.subr.mxu0 0.0
          %1789 = vmatpush1.xpose.msra.mxu0 0.0
          %1790 = vmatprep.subr.mxu0 0.0
          %1791 = vmatpush1.xpose.msra.mxu0 0.0
          %1792 = vmatprep.subr.mxu0 0.0
          %1793 = vmatpush1.xpose.msra.mxu0 0.0
          %1794 = vmatprep.subr.mxu0 0.0
          %1795 = vmatpush1.xpose.msra.mxu0 0.0
          %1796 = vmatprep.subr.mxu0 0.0
          %1797 = vmatpush1.xpose.msra.mxu0 0.0
          %1798 = vmatprep.subr.mxu0 0.0
          %1799 = vmatpush1.xpose.msra.mxu0 0.0
          %1800 = vmatprep.subr.mxu0 0.0
          %1801 = vmatpush1.xpose.msra.mxu0 0.0
          %1802 = vmatprep.subr.mxu0 0.0
          %1803 = vmatpush1.xpose.msra.mxu0 0.0
          %1804 = vmatprep.subr.mxu0 0.0
          %1805 = vmatpush1.xpose.msra.mxu0 0.0
          %1806 = vmatprep.subr.mxu0 0.0
          %1807 = vmatpush1.xpose.msra.mxu0 0.0
          %1808 = vmatprep.subr.mxu0 0.0
          %1809 = vmatpush1.xpose.msra.mxu0 0.0
          %1810 = vmatprep.subr.mxu0 0.0
          %1811 = vmatpush1.xpose.msra.mxu0 0.0
          %1812 = vmatprep.subr.mxu0 0.0
          %1813 = vmatpush1.xpose.msra.mxu0 0.0
          %1814 = vmatprep.subr.mxu0 0.0
          %1815 = vmatpush1.xpose.msra.mxu0 0.0
          %1816 = vmatprep.mubr.f32.mxu0 0.0
          %1817 = vmatmul.mubr.f32.gmra.mrb[0].mxu0 %v1748
          %v1818 = vpop.f32.mrb[0].mxu0
          %v1819 = vadd.f32 0.0, %v1818
          %v1820 = vpop.f32.mrb[0].mxu0
          %1821 = vdwg.mxu0
          %v1822 = vsel %vm831, %v1819, -inf
          %1823 = vmax.xlane.f32.xlu0 %v1822
          %v1824 = vpop.xlane.xlu0 %1823
          %v1825 = vmax.f32 %v1735, %v1824
          %v1826 = vsub.f32 %v1735, %v1825
          %v1827 = vmul.f32 %v1826, 1.442695
          %v1828 = vpow.pop %v1827
          %v1829 = vsub.f32 %v1819, %v1825
          %v1830 = vmul.f32 %v1829, 1.442695
          %v1831 = vpow.pop %v1830
          %v1832 = vmul.f32 %v1828, %v1736
          %v1833 = vsel %vm831, %v1831, 0.0
          %1834 = vadd.xlane.f32.xlu0 %v1833
          %v1835 = vpop.xlane.xlu0 %1834
          %v1836 = vadd.f32 %v1832, %v1835
          %v1837 = vmul.f32 %v1828, %v1737
          %1839 = vrot.lane.b32.xlu0 %v1742, 104
          %v1840 = vpop.permute.xlu0 %1839
          %v1843 = vsel %vm831, %v1831, 0
          %1845 = vmatprep.subr.mxu0 0.0
          %1846 = vmatpush1.msra.mxu0 %v1840
          %1847 = vmatprep.subr.mxu0 0.0
          %1848 = vmatpush1.msra.mxu0 0.0
          %1849 = vmatprep.subr.mxu0 0.0
          %1850 = vmatpush1.msra.mxu0 0.0
          %1851 = vmatprep.subr.mxu0 0.0
          %1852 = vmatpush1.msra.mxu0 0.0
          %1853 = vmatprep.subr.mxu0 0.0
          %1854 = vmatpush1.msra.mxu0 0.0
          %1855 = vmatprep.subr.mxu0 0.0
          %1856 = vmatpush1.msra.mxu0 0.0
          %1857 = vmatprep.subr.mxu0 0.0
          %1858 = vmatpush1.msra.mxu0 0.0
          %1859 = vmatprep.subr.mxu0 0.0
          %1860 = vmatpush1.msra.mxu0 0.0
          %1861 = vmatprep.subr.mxu0 0.0
          %1862 = vmatpush1.msra.mxu0 0.0
          %1863 = vmatprep.subr.mxu0 0.0
          %1864 = vmatpush1.msra.mxu0 0.0
          %1865 = vmatprep.subr.mxu0 0.0
          %1866 = vmatpush1.msra.mxu0 0.0
          %1867 = vmatprep.subr.mxu0 0.0
          %1868 = vmatpush1.msra.mxu0 0.0
          %1869 = vmatprep.subr.mxu0 0.0
          %1870 = vmatpush1.msra.mxu0 0.0
          %1871 = vmatprep.subr.mxu0 0.0
          %1872 = vmatpush1.msra.mxu0 0.0
          %1873 = vmatprep.subr.mxu0 0.0
          %1874 = vmatpush1.msra.mxu0 0.0
          %1875 = vmatprep.subr.mxu0 0.0
          %1876 = vmatpush1.msra.mxu0 0.0
          %1877 = vmatprep.subr.mxu0 0.0
          %1878 = vmatpush1.msra.mxu0 0.0
          %1879 = vmatprep.subr.mxu0 0.0
          %1880 = vmatpush1.msra.mxu0 0.0
          %1881 = vmatprep.subr.mxu0 0.0
          %1882 = vmatpush1.msra.mxu0 0.0
          %1883 = vmatprep.subr.mxu0 0.0
          %1884 = vmatpush1.msra.mxu0 0.0
          %1885 = vmatprep.subr.mxu0 0.0
          %1886 = vmatpush1.msra.mxu0 0.0
          %1887 = vmatprep.subr.mxu0 0.0
          %1888 = vmatpush1.msra.mxu0 0.0
          %1889 = vmatprep.subr.mxu0 0.0
          %1890 = vmatpush1.msra.mxu0 0.0
          %1891 = vmatprep.subr.mxu0 0.0
          %1892 = vmatpush1.msra.mxu0 0.0
          %1893 = vmatprep.subr.mxu0 0.0
          %1894 = vmatpush1.msra.mxu0 0.0
          %1895 = vmatprep.subr.mxu0 0.0
          %1896 = vmatpush1.msra.mxu0 0.0
          %1897 = vmatprep.subr.mxu0 0.0
          %1898 = vmatpush1.msra.mxu0 0.0
          %1899 = vmatprep.subr.mxu0 0.0
          %1900 = vmatpush1.msra.mxu0 0.0
          %1901 = vmatprep.subr.mxu0 0.0
          %1902 = vmatpush1.msra.mxu0 0.0
          %1903 = vmatprep.subr.mxu0 0.0
          %1904 = vmatpush1.msra.mxu0 0.0
          %1905 = vmatprep.subr.mxu0 0.0
          %1906 = vmatpush1.msra.mxu0 0.0
          %1907 = vmatprep.subr.mxu0 0.0
          %1908 = vmatpush1.msra.mxu0 0.0
          %1909 = vmatprep.mubr.f32.mxu0 0.0
          %1910 = vmatmul.mubr.f32.gmra.mrb[0].mxu0 %v1843
          %v1911 = vpop.f32.mrb[0].mxu0
          %v1912 = vadd.f32 0.0, %v1911
          %v1913 = vpop.f32.mrb[0].mxu0
          %1914 = vdwg.mxu0
          %v1915 = vadd.f32 %v1837, %v1912
        $region102: #{tpu_custom_call.1} parent=47 // loop_footer
          %s1732 = sadd.s32 %s1730, 1
        $region103: #{tpu_custom_call.1} parent=47 // loop_footer_branch
          %1729 = sbr.rel target = $region99
        $region104: #{tpu_custom_call.1} parent=47 // loop_exit
          _
        %1916 = vrot.lane.b32.xlu0 %v644, 104
        %v1917 = vpop.permute.xlu0 %1916
        %1918 = vrot.lane.b32.xlu0 %v828, 104
        %v1919 = vpop.permute.xlu0 %1918
        %v1920 = vsel %vm831, %v1917, 0
        %v1922 = vsel %vm831, %v1919, 0
        %1924 = vmatprep.subr.mxu0 0.0
        %1925 = vmatpush1.xpose.msra.mxu0 %v1922
        %1926 = vmatprep.subr.mxu0 0.0
        %1927 = vmatpush1.xpose.msra.mxu0 0.0
        %1928 = vmatprep.subr.mxu0 0.0
        %1929 = vmatpush1.xpose.msra.mxu0 0.0
        %1930 = vmatprep.subr.mxu0 0.0
        %1931 = vmatpush1.xpose.msra.mxu0 0.0
        %1932 = vmatprep.subr.mxu0 0.0
        %1933 = vmatpush1.xpose.msra.mxu0 0.0
        %1934 = vmatprep.subr.mxu0 0.0
        %1935 = vmatpush1.xpose.msra.mxu0 0.0
        %1936 = vmatprep.subr.mxu0 0.0
        %1937 = vmatpush1.xpose.msra.mxu0 0.0
        %1938 = vmatprep.subr.mxu0 0.0
        %1939 = vmatpush1.xpose.msra.mxu0 0.0
        %1940 = vmatprep.subr.mxu0 0.0
        %1941 = vmatpush1.xpose.msra.mxu0 0.0
        %1942 = vmatprep.subr.mxu0 0.0
        %1943 = vmatpush1.xpose.msra.mxu0 0.0
        %1944 = vmatprep.subr.mxu0 0.0
        %1945 = vmatpush1.xpose.msra.mxu0 0.0
        %1946 = vmatprep.subr.mxu0 0.0
        %1947 = vmatpush1.xpose.msra.mxu0 0.0
        %1948 = vmatprep.subr.mxu0 0.0
        %1949 = vmatpush1.xpose.msra.mxu0 0.0
        %1950 = vmatprep.subr.mxu0 0.0
        %1951 = vmatpush1.xpose.msra.mxu0 0.0
        %1952 = vmatprep.subr.mxu0 0.0
        %1953 = vmatpush1.xpose.msra.mxu0 0.0
        %1954 = vmatprep.subr.mxu0 0.0
        %1955 = vmatpush1.xpose.msra.mxu0 0.0
        %1956 = vmatprep.subr.mxu0 0.0
        %1957 = vmatpush1.xpose.msra.mxu0 0.0
        %1958 = vmatprep.subr.mxu0 0.0
        %1959 = vmatpush1.xpose.msra.mxu0 0.0
        %1960 = vmatprep.subr.mxu0 0.0
        %1961 = vmatpush1.xpose.msra.mxu0 0.0
        %1962 = vmatprep.subr.mxu0 0.0
        %1963 = vmatpush1.xpose.msra.mxu0 0.0
        %1964 = vmatprep.subr.mxu0 0.0
        %1965 = vmatpush1.xpose.msra.mxu0 0.0
        %1966 = vmatprep.subr.mxu0 0.0
        %1967 = vmatpush1.xpose.msra.mxu0 0.0
        %1968 = vmatprep.subr.mxu0 0.0
        %1969 = vmatpush1.xpose.msra.mxu0 0.0
        %1970 = vmatprep.subr.mxu0 0.0
        %1971 = vmatpush1.xpose.msra.mxu0 0.0
        %1972 = vmatprep.subr.mxu0 0.0
        %1973 = vmatpush1.xpose.msra.mxu0 0.0
        %1974 = vmatprep.subr.mxu0 0.0
        %1975 = vmatpush1.xpose.msra.mxu0 0.0
        %1976 = vmatprep.subr.mxu0 0.0
        %1977 = vmatpush1.xpose.msra.mxu0 0.0
        %1978 = vmatprep.subr.mxu0 0.0
        %1979 = vmatpush1.xpose.msra.mxu0 0.0
        %1980 = vmatprep.subr.mxu0 0.0
        %1981 = vmatpush1.xpose.msra.mxu0 0.0
        %1982 = vmatprep.subr.mxu0 0.0
        %1983 = vmatpush1.xpose.msra.mxu0 0.0
        %1984 = vmatprep.subr.mxu0 0.0
        %1985 = vmatpush1.xpose.msra.mxu0 0.0
        %1986 = vmatprep.subr.mxu0 0.0
        %1987 = vmatpush1.xpose.msra.mxu0 0.0
        %1988 = vmatprep.mubr.f32.mxu0 0.0
        %1989 = vmatmul.mubr.f32.gmra.mrb[0].mxu0 %v1920
        %v1990 = vpop.f32.mrb[0].mxu0
        %v1991 = vadd.f32 0.0, %v1990
        %v1992 = vpop.f32.mrb[0].mxu0
        %1993 = vdwg.mxu0
        %v1994 = vsel %vm912, %v1991, -inf
        %v1995 = vsel %vm831, %v1994, -inf
        %1996 = vmax.xlane.f32.xlu0 %v1995
        %v1997 = vpop.xlane.xlu0 %1996
        %v1998 = vmax.f32 %v1735, %v1997
        %v1999 = vsub.f32 %v1735, %v1998
        %v2000 = vmul.f32 %v1999, 1.442695
        %v2001 = vpow.pop %v2000
        %v2002 = vsub.f32 %v1994, %v1998
        %v2003 = vmul.f32 %v2002, 1.442695
        %v2004 = vpow.pop %v2003
        %v2005 = vmul.f32 %v2001, %v1736
        %v2006 = vsel %vm831, %v2004, 0.0
        %2007 = vadd.xlane.f32.xlu0 %v2006
        %v2008 = vpop.xlane.xlu0 %2007
        %v2009 = vadd.f32 %v2005, %v2008
        %v2010 = vmul.f32 %v2001, %v1737
        %2011 = vrot.lane.b32.xlu0 %v830, 104
        %v2012 = vpop.permute.xlu0 %2011
        %v2015 = vsel %vm831, %v2004, 0
        %2017 = vmatprep.subr.mxu0 0.0
        %2018 = vmatpush1.msra.mxu0 %v2012
        %2019 = vmatprep.subr.mxu0 0.0
        %2020 = vmatpush1.msra.mxu0 0.0
        %2021 = vmatprep.subr.mxu0 0.0
        %2022 = vmatpush1.msra.mxu0 0.0
        %2023 = vmatprep.subr.mxu0 0.0
        %2024 = vmatpush1.msra.mxu0 0.0
        %2025 = vmatprep.subr.mxu0 0.0
        %2026 = vmatpush1.msra.mxu0 0.0
        %2027 = vmatprep.subr.mxu0 0.0
        %2028 = vmatpush1.msra.mxu0 0.0
        %2029 = vmatprep.subr.mxu0 0.0
        %2030 = vmatpush1.msra.mxu0 0.0
        %2031 = vmatprep.subr.mxu0 0.0
        %2032 = vmatpush1.msra.mxu0 0.0
        %2033 = vmatprep.subr.mxu0 0.0
        %2034 = vmatpush1.msra.mxu0 0.0
        %2035 = vmatprep.subr.mxu0 0.0
        %2036 = vmatpush1.msra.mxu0 0.0
        %2037 = vmatprep.subr.mxu0 0.0
        %2038 = vmatpush1.msra.mxu0 0.0
        %2039 = vmatprep.subr.mxu0 0.0
        %2040 = vmatpush1.msra.mxu0 0.0
        %2041 = vmatprep.subr.mxu0 0.0
        %2042 = vmatpush1.msra.mxu0 0.0
        %2043 = vmatprep.subr.mxu0 0.0
        %2044 = vmatpush1.msra.mxu0 0.0
        %2045 = vmatprep.subr.mxu0 0.0
        %2046 = vmatpush1.msra.mxu0 0.0
        %2047 = vmatprep.subr.mxu0 0.0
        %2048 = vmatpush1.msra.mxu0 0.0
        %2049 = vmatprep.subr.mxu0 0.0
        %2050 = vmatpush1.msra.mxu0 0.0
        %2051 = vmatprep.subr.mxu0 0.0
        %2052 = vmatpush1.msra.mxu0 0.0
        %2053 = vmatprep.subr.mxu0 0.0
        %2054 = vmatpush1.msra.mxu0 0.0
        %2055 = vmatprep.subr.mxu0 0.0
        %2056 = vmatpush1.msra.mxu0 0.0
        %2057 = vmatprep.subr.mxu0 0.0
        %2058 = vmatpush1.msra.mxu0 0.0
        %2059 = vmatprep.subr.mxu0 0.0
        %2060 = vmatpush1.msra.mxu0 0.0
        %2061 = vmatprep.subr.mxu0 0.0
        %2062 = vmatpush1.msra.mxu0 0.0
        %2063 = vmatprep.subr.mxu0 0.0
        %2064 = vmatpush1.msra.mxu0 0.0
        %2065 = vmatprep.subr.mxu0 0.0
        %2066 = vmatpush1.msra.mxu0 0.0
        %2067 = vmatprep.subr.mxu0 0.0
        %2068 = vmatpush1.msra.mxu0 0.0
        %2069 = vmatprep.subr.mxu0 0.0
        %2070 = vmatpush1.msra.mxu0 0.0
        %2071 = vmatprep.subr.mxu0 0.0
        %2072 = vmatpush1.msra.mxu0 0.0
        %2073 = vmatprep.subr.mxu0 0.0
        %2074 = vmatpush1.msra.mxu0 0.0
        %2075 = vmatprep.subr.mxu0 0.0
        %2076 = vmatpush1.msra.mxu0 0.0
        %2077 = vmatprep.subr.mxu0 0.0
        %2078 = vmatpush1.msra.mxu0 0.0
        %2079 = vmatprep.subr.mxu0 0.0
        %2080 = vmatpush1.msra.mxu0 0.0
        %2081 = vmatprep.mubr.f32.mxu0 0.0
        %2082 = vmatmul.mubr.f32.gmra.mrb[0].mxu0 %v2015
        %v2083 = vpop.f32.mrb[0].mxu0
        %v2084 = vadd.f32 0.0, %v2083
        %v2085 = vpop.f32.mrb[0].mxu0
        %2086 = vdwg.mxu0
        %v2087 = vadd.f32 %v2010, %v2084
        %v2088 = vrcp.pop %v2009
        %v2089 = vmul.f32 %v2087, %v2088
        %2091 = vrot.lane.b32.xlu0 %v1367, 8
        %v2092 = vpop.permute.xlu0 %2091
        %2095 = vrot.lane.b32.xlu0 %v1728, 16
        %v2096 = vpop.permute.xlu0 %2095
        %2099 = vrot.lane.b32.xlu0 %v2089, 24
        %v2100 = vpop.permute.xlu0 %2099
        %v2102 = vsel %vm831, %v1005, %v2092
        %vm2103 = vcmask 130048
        %v2104 = vsel %vm2103, %v2102, %v2096
        %vm2105 = vcmask 195584
        %v2106 = vsel %vm2105, %v2104, %v2100
        %v2107 = vld [vmem:[#allocation13] sm:$0xff]
        %v2108 = vld [vmem:[#allocation13 + $0x8] sm:$0xff]
        %v2109 = vld [vmem:[#allocation13 + $0x10] sm:$0xff]
        %v2110 = vld [vmem:[#allocation13 + $0x18] sm:$0xff]
        %v2111 = vld [vmem:[%s6] sm:$0x1]
        %v2113 = vlaneseq
        %v2114 = vshrl.u32 %v2113, 7
        %v2115 = vsub.s32 0, %v2114
        %v2116 = vrot.slane %v2111, %v2115
        %v2119 = vsel %vm570, %v2106, 0
        %2121 = vmatprep.subr.mxu0 0.0
        %2122 = vmatpush1.msra.mxu0 %v2107
        %2123 = vmatprep.subr.mxu0 0.0
        %2124 = vmatpush1.msra.mxu0 %v2108
        %2125 = vmatprep.subr.mxu0 0.0
        %2126 = vmatpush1.msra.mxu0 %v2109
        %2127 = vmatprep.subr.mxu0 0.0
        %2128 = vmatpush1.msra.mxu0 %v2110
        %2129 = vmatprep.subr.mxu0 0.0
        %2130 = vmatpush1.msra.mxu0 0.0
        %2131 = vmatprep.subr.mxu0 0.0
        %2132 = vmatpush1.msra.mxu0 0.0
        %2133 = vmatprep.subr.mxu0 0.0
        %2134 = vmatpush1.msra.mxu0 0.0
        %2135 = vmatprep.subr.mxu0 0.0
        %2136 = vmatpush1.msra.mxu0 0.0
        %2137 = vmatprep.subr.mxu0 0.0
        %2138 = vmatpush1.msra.mxu0 0.0
        %2139 = vmatprep.subr.mxu0 0.0
        %2140 = vmatpush1.msra.mxu0 0.0
        %2141 = vmatprep.subr.mxu0 0.0
        %2142 = vmatpush1.msra.mxu0 0.0
        %2143 = vmatprep.subr.mxu0 0.0
        %2144 = vmatpush1.msra.mxu0 0.0
        %2145 = vmatprep.subr.mxu0 0.0
        %2146 = vmatpush1.msra.mxu0 0.0
        %2147 = vmatprep.subr.mxu0 0.0
        %2148 = vmatpush1.msra.mxu0 0.0
        %2149 = vmatprep.subr.mxu0 0.0
        %2150 = vmatpush1.msra.mxu0 0.0
        %2151 = vmatprep.subr.mxu0 0.0
        %2152 = vmatpush1.msra.mxu0 0.0
        %2153 = vmatprep.subr.mxu0 0.0
        %2154 = vmatpush1.msra.mxu0 0.0
        %2155 = vmatprep.subr.mxu0 0.0
        %2156 = vmatpush1.msra.mxu0 0.0
        %2157 = vmatprep.subr.mxu0 0.0
        %2158 = vmatpush1.msra.mxu0 0.0
        %2159 = vmatprep.subr.mxu0 0.0
        %2160 = vmatpush1.msra.mxu0 0.0
        %2161 = vmatprep.subr.mxu0 0.0
        %2162 = vmatpush1.msra.mxu0 0.0
        %2163 = vmatprep.subr.mxu0 0.0
        %2164 = vmatpush1.msra.mxu0 0.0
        %2165 = vmatprep.subr.mxu0 0.0
        %2166 = vmatpush1.msra.mxu0 0.0
        %2167 = vmatprep.subr.mxu0 0.0
        %2168 = vmatpush1.msra.mxu0 0.0
        %2169 = vmatprep.subr.mxu0 0.0
        %2170 = vmatpush1.msra.mxu0 0.0
        %2171 = vmatprep.subr.mxu0 0.0
        %2172 = vmatpush1.msra.mxu0 0.0
        %2173 = vmatprep.subr.mxu0 0.0
        %2174 = vmatpush1.msra.mxu0 0.0
        %2175 = vmatprep.subr.mxu0 0.0
        %2176 = vmatpush1.msra.mxu0 0.0
        %2177 = vmatprep.subr.mxu0 0.0
        %2178 = vmatpush1.msra.mxu0 0.0
        %2179 = vmatprep.subr.mxu0 0.0
        %2180 = vmatpush1.msra.mxu0 0.0
        %2181 = vmatprep.subr.mxu0 0.0
        %2182 = vmatpush1.msra.mxu0 0.0
        %2183 = vmatprep.subr.mxu0 0.0
        %2184 = vmatpush1.msra.mxu0 0.0
        %2185 = vmatprep.mubr.f32.mxu0 0.0
        %2186 = vmatmul.mubr.f32.gmra.mrb[0].mxu0 %v2119
        %v2187 = vpop.f32.mrb[0].mxu0
        %v2188 = vadd.f32 %v2116, %v2187
        %v2189 = vpop.f32.mrb[0].mxu0
        %2190 = vdwg.mxu0
        %2191 = vst.msk [vmem:[%s405] sm:$0xff] %vm570, %v2188
        %s2192 = sand.u32 %s210, 1
        %s2193 = scalar_lea.sflag [#allocation6], %s2192
        %s2194 = sand.u32 %s210, 1
        %s2195 = smul.addr %s2194, 8
        %s2196 = scalar_lea.vmem [#allocation15], %s2195
        // Predicated region
        $region105: #{tpu_custom_call.1} parent=47 // pred_check
          %p2197 = pneg %p220
        $region106: #{tpu_custom_call.1} parent=47 // pred_check_branch
          %2199 = sbr.rel (%p2197) target = $region108
        $region107: #{tpu_custom_call.1} parent=47 // pred_region
          %s2201 = ssub.s32 128, 128
          %2202 = vsyncadd %s2193, %s2201
          %s2203 = sadd.s32 %s34, %s33
          %s2204 = smul.addr %s2203, 128
          %s2205 = scalar_lea.hbm %s7, %s2204
          %s2207 = sshll.u32 %s2196, 4
          %s2208 = int_to_ptr.vmem [resolvable:$true] %s2207
          %2210 = dma.vmem_to_hbm [thread:$0]  %s2208, 128, %s2205, %s2193
        $region108: #{tpu_custom_call.1} parent=47 // pred_fallthru
          _
      $region48: #{tpu_custom_call.1} parent=5 // pred_fallthru
        _
      %p2211 = scmp.le.s32.totalorder 2, %s24
      // Predicated region
      $region109: #{tpu_custom_call.1} parent=5 // pred_check
        %p2212 = pneg %p2211
      $region110: #{tpu_custom_call.1} parent=5 // pred_check_branch
        %2214 = sbr.rel (%p2212) target = $region112
      $region111: #{tpu_custom_call.1} parent=5 // pred_region
        %s2215 = ssub.s32 %s24, 2
        // Predicated region
        $region113: #{tpu_custom_call.1} parent=111 // pred_check
          %p2216 = pneg %p226
        $region114: #{tpu_custom_call.1} parent=111 // pred_check_branch
          %2218 = sbr.rel (%p2216) target = $region116
        $region115: #{tpu_custom_call.1} parent=111 // pred_region
          %s2219 = sand.u32 %s211, 1
          %s2220 = scalar_lea.sflag [#allocation6], %s2219
          %s2221 = sand.u32 %s211, 1
          %s2222 = smul.addr %s2221, 8
          %s2223 = scalar_lea.vmem [#allocation15], %s2222
          %2224 = dma.done %s2220, 128
        $region116: #{tpu_custom_call.1} parent=111 // pred_fallthru
          _
      $region112: #{tpu_custom_call.1} parent=5 // pred_fallthru
        _
    $region6: #{tpu_custom_call.1} parent=1 // loop_footer
      %s28 = sadd.s32 1, %s24
    $region7: #{tpu_custom_call.1} parent=1 // loop_footer_branch
      %23 = sbr.rel target = $region3
    $region8: #{tpu_custom_call.1} parent=1 // loop_exit
      _
    %2225 = vsyncpa [#allocation5], 1
    %s2226 = scalar_lea.sflag [#allocation5], 1
    %2227 = vsyncpa %s2226, 1
    %2228 = vsyncpa [#allocation8], 1
    %s2229 = scalar_lea.sflag [#allocation8], 1
    %2230 = vsyncpa %s2229, 1
    %2231 = vsyncpa [#allocation11], 1
    %2232 = vsyncpa [#allocation14], 1
    %2233 = vsyncpa [#allocation6], 1
    %s2234 = scalar_lea.sflag [#allocation6], 1
    %2235 = vsyncpa %s2234, 1

</llo_original>
